<compile_context>
chip_gen: v6e
topology: v6e:2x2x1
jax: 0.10.0
libtpu: 0.0.40
codegen_flags: <defaults>
</compile_context>

<pallas_src>
import numpy as np
import jax
import jax.numpy as jnp
from jax import lax
from jax.experimental import pallas as pl
from jax.experimental.pallas import tpu as pltpu


def get_filters_np(kernel_name="db3"):
    """1-D analysis filters (t1 = low-pass, t2 = high-pass), numpy float32."""
    if kernel_name == "haar":
        t1 = np.array([0.7071067, 0.7071067], dtype=np.float32)
        t2 = np.array([-0.7071067, 0.7071067], dtype=np.float32)
    elif kernel_name == "db2":
        t1 = np.array([-0.1294095, 0.22414386, 0.8365163, 0.4829629], dtype=np.float32)
        t2 = np.array([-0.4829629, 0.8365163, -0.22414386, -0.1294095], dtype=np.float32)
    elif kernel_name == "db3":
        t1 = np.array([0.0352262, -0.0854412, -0.135011, 0.4598775, 0.8068915, 0.3326705],
                      dtype=np.float32)
        t2 = np.array([-0.3326705, 0.8068915, -0.4598775, -0.135011, 0.0854412, 0.0352262],
                      dtype=np.float32)
    elif kernel_name == "sym2":
        t1 = np.array([-0.129409, 0.2241438, 0.8365163, 0.4829629], dtype=np.float32)
        t2 = np.array([-0.4829629, 0.8365163, -0.2241438, -0.129409], dtype=np.float32)
    else:
        raise ValueError(f"Invalid kernel {kernel_name}")
    return t1, t2


def get_kernel_np(kernel_name="db3", reverse=False):
    """Numpy port of get_kernel(): the full (4, K, K) filter bank (for the reference)."""
    t1, t2 = get_filters_np(kernel_name)
    t1 = t1.reshape(-1, 1)
    t2 = t2.reshape(-1, 1)
    if reverse:
        t1 = t1[::-1]
        t2 = t2[::-1]
    K = t1.shape[0]
    k = np.zeros((4, K, K), dtype=np.float32)
    k[0] = t1 @ t1.T
    k[1] = t1 @ t2.T
    k[2] = t2 @ t1.T
    k[3] = t2 @ t2.T
    return k


def make_dwt_kernel(t1, t2, K, Nb, Hph, Wph, Ho, Wo):
    """Builds the Pallas kernel body.  Filter taps are baked in as constants.

    Input block : (Nb, 4, Hph, Wph) -- the 4 stride-2 phases of Nb padded images,
                  phase p = 2*r + c holds x_pad[2i + r, 2j + c].
    Output block: (Nb, 4, Ho, Wo)   -- the 4 sub-bands (LL, LH, HL, HH).
    """
    Kh = K // 2  # all supported wavelets have even K
    t1 = [float(v) for v in t1]
    t2 = [float(v) for v in t2]

    def kernel(ph_ref, o_ref):
        # Load the whole block once; all further slicing is value-level.
        ph = ph_ref[...].astype(jnp.float32)  # (Nb, 4, Hph, Wph)

        # Hoisted column (lane-offset) slices: cs[p][b] = phase_p[:, :, b:b+Wo].
        # 4 phases x Kh offsets = 12 slices, each reused by t1 and t2 passes.
        cs = [[ph[:, p, :, b:b + Wo] for b in range(Kh)] for p in range(4)]

        # Horizontal separable pass: filter f along W for row-phase r.
        #   out[i'', j] = sum_kw f[kw] * x_pad[2*i'' + r, 2*j + kw]
        def hpass(f, r):
            acc = f[0] * cs[2 * r + 0][0] + f[1] * cs[2 * r + 1][0]
            for b in range(1, Kh):
                acc = acc + f[2 * b] * cs[2 * r + 0][b] + f[2 * b + 1] * cs[2 * r + 1][b]
            return acc  # (Nb, Hph, Wo)

        L0 = hpass(t1, 0)   # low-pass cols, even padded rows
        L1 = hpass(t1, 1)   # low-pass cols, odd padded rows
        H0 = hpass(t2, 0)   # high-pass cols, even padded rows
        H1 = hpass(t2, 1)   # high-pass cols, odd padded rows

        # Hoisted row (sublane-offset) slices: rs[s][a] = src_s[:, a:a+Ho, :].
        # 4 sources x Kh offsets = 12 slices, each reused by t1 and t2 passes.
        src = (L0, L1, H0, H1)
        rs = [[s[:, a:a + Ho, :] for a in range(Kh)] for s in src]

        # Vertical separable pass: filter f along H combining both row-phases.
        def vpass(f, s0, s1):
            acc = f[0] * s0[0] + f[1] * s1[0]
            for a in range(1, Kh):
                acc = acc + f[2 * a] * s0[a] + f[2 * a + 1] * s1[a]
            return acc  # (Nb, Ho, Wo)

        # Sub-band order matches get_kernel(): [t1t1, t1t2, t2t1, t2t2].
        o_ref[:, 0] = vpass(t1, rs[0], rs[1]).astype(o_ref.dtype)  # LL
        o_ref[:, 1] = vpass(t1, rs[2], rs[3]).astype(o_ref.dtype)  # LH
        o_ref[:, 2] = vpass(t2, rs[0], rs[1]).astype(o_ref.dtype)  # HL
        o_ref[:, 3] = vpass(t2, rs[2], rs[3]).astype(o_ref.dtype)  # HH

    return kernel


def dwt_forward(x, kernel_name="db3", block_budget_bytes=4 * 1024 * 1024):
    """Forward pass equivalent to dwt(kernel_name).forward(x) for NCHW x."""
    t1, t2 = get_filters_np(kernel_name)
    K = int(t1.shape[0])
    pad = (K - 2) // 2
    B, C, H, W = x.shape
    BC = B * C
    Ho = (H + 2 * pad - K) // 2 + 1
    Wo = (W + 2 * pad - K) // 2 + 1

    # Pad; round padded dims up to even so the phase decomposition is exact
    # (the extra zero row/col is never read by any valid output position).
    Hp, Wp = H + 2 * pad, W + 2 * pad
    eh, ew = Hp % 2, Wp % 2
    xp = jnp.pad(x.reshape(BC, H, W), ((0, 0), (pad, pad + eh), (pad, pad + ew)))
    Hph, Wph = (Hp + eh) // 2, (Wp + ew) // 2

    # Stride-2 phase split: phases[:, 2r+c, i, j] = x_pad[:, 2i+r, 2j+c].
    # (allow_input_fusion lets XLA fuse this producer into the pallas operand.)
    phases = (
        xp.reshape(BC, Hph, 2, Wph, 2)
          .transpose(0, 2, 4, 1, 3)
          .reshape(BC, 4, Hph, Wph)
    )

    # Batch Nb images per grid step: amortize per-step overhead, fill VMEM
    # within a budget that also fits v5e's 16 MiB default scoped VMEM.
    per_img_vmem = (
        2 * 4 * Hph * Wph * 4     # double-buffered input block (f32)
        + 2 * 4 * Ho * Wo * 4     # double-buffered output block
        + 4 * Hph * Wo * 4        # live separable intermediates
    )
    nb_max = max(1, block_budget_bytes // max(per_img_vmem, 1))
    Nb = 1
    for d in range(1, BC + 1):
        if BC % d == 0 and d <= nb_max:
            Nb = d

    out = pl.pallas_call(
        make_dwt_kernel(t1, t2, K, Nb, Hph, Wph, Ho, Wo),
        out_shape=jax.ShapeDtypeStruct((BC, 4, Ho, Wo), x.dtype),
        grid=(BC // Nb,),
        in_specs=[pl.BlockSpec((Nb, 4, Hph, Wph), lambda i: (i, 0, 0, 0))],
        out_specs=pl.BlockSpec((Nb, 4, Ho, Wo), lambda i: (i, 0, 0, 0)),
        compiler_params=pltpu.CompilerParams(
            dimension_semantics=("parallel",),
            vmem_limit_bytes=32 * 1024 * 1024,
            allow_input_fusion=[True],
        ),
    )(phases)

    # (B*C, 4, Ho, Wo) -> (B, 4*C, Ho, Wo), same reshape as the PyTorch module.
    return out.reshape(B, C * 4, Ho, Wo)


def dwt_reference(x, kernel_name="db3"):
    """Pure-JAX reference (lax conv) for correctness checking."""
    w = jnp.asarray(get_kernel_np(kernel_name))[:, None]  # (4, 1, K, K)
    K = w.shape[-1]
    pad = (K - 2) // 2
    B, C, H, W = x.shape
    y = lax.conv_general_dilated(
        x.reshape(B * C, 1, H, W), w,
        window_strides=(2, 2),
        padding=((pad, pad), (pad, pad)),
        dimension_numbers=("NCHW", "OIHW", "NCHW"),
    )
    return y.reshape(B, C * 4, y.shape[-2], y.shape[-1])


if __name__ == "__main__":
    key = jax.random.PRNGKey(0)
    x = jax.random.normal(key, (2, 4, 16, 16), dtype=jnp.float32)

    out = dwt_forward(x, kernel_name="db3")
    jax.block_until_ready(out)

    assert out.shape == (2, 16, 8, 8), out.shape
    ref = dwt_reference(x, kernel_name="db3")
    np.testing.assert_allclose(np.asarray(out), np.asarray(ref), rtol=1e-5, atol=1e-5)

    print("KERNEL_OK")
</pallas_src>

<mosaic_0001>
module attributes {stable_mosaic.version = 11 : i64} {
  func.func @kernel(%arg0: i32, %arg1: memref<8x4x10x10xf32, #tpu.memory_space<vmem>>, %arg2: memref<8x4x8x8xf32, #tpu.memory_space<vmem>>) attributes {dimension_semantics = [#tpu.dimension_semantics<parallel>], iteration_bounds = array<i64: 1>, scalar_prefetch = 0 : i64, scratch_operands = 0 : i64, tpu.core_type = #tpu.core_type<tc>, window_params = [{transform_indices = @transform_0, window_bounds = array<i64: 8, 4, 10, 10>}, {transform_indices = @transform_1, window_bounds = array<i64: 8, 4, 8, 8>}]} {
    %c0 = arith.constant 0 : index
    %c0_0 = arith.constant 0 : index
    %c0_1 = arith.constant 0 : index
    %c0_2 = arith.constant 0 : index
    %0 = vector.load %arg1[%c0, %c0_0, %c0_1, %c0_2] : memref<8x4x10x10xf32, #tpu.memory_space<vmem>>, vector<8x4x10x10xf32>
    %1 = vector.extract_strided_slice %0 {offsets = [0, 0, 0, 0], sizes = [8, 1, 10, 8], strides = [1, 1, 1, 1]} : vector<8x4x10x10xf32> to vector<8x1x10x8xf32>
    %2 = vector.shape_cast %1 : vector<8x1x10x8xf32> to vector<8x10x8xf32>
    %3 = vector.extract_strided_slice %0 {offsets = [0, 0, 0, 1], sizes = [8, 1, 10, 8], strides = [1, 1, 1, 1]} : vector<8x4x10x10xf32> to vector<8x1x10x8xf32>
    %4 = vector.shape_cast %3 : vector<8x1x10x8xf32> to vector<8x10x8xf32>
    %5 = vector.extract_strided_slice %0 {offsets = [0, 0, 0, 2], sizes = [8, 1, 10, 8], strides = [1, 1, 1, 1]} : vector<8x4x10x10xf32> to vector<8x1x10x8xf32>
    %6 = vector.shape_cast %5 : vector<8x1x10x8xf32> to vector<8x10x8xf32>
    %7 = vector.extract_strided_slice %0 {offsets = [0, 1, 0, 0], sizes = [8, 1, 10, 8], strides = [1, 1, 1, 1]} : vector<8x4x10x10xf32> to vector<8x1x10x8xf32>
    %8 = vector.shape_cast %7 : vector<8x1x10x8xf32> to vector<8x10x8xf32>
    %9 = vector.extract_strided_slice %0 {offsets = [0, 1, 0, 1], sizes = [8, 1, 10, 8], strides = [1, 1, 1, 1]} : vector<8x4x10x10xf32> to vector<8x1x10x8xf32>
    %10 = vector.shape_cast %9 : vector<8x1x10x8xf32> to vector<8x10x8xf32>
    %11 = vector.extract_strided_slice %0 {offsets = [0, 1, 0, 2], sizes = [8, 1, 10, 8], strides = [1, 1, 1, 1]} : vector<8x4x10x10xf32> to vector<8x1x10x8xf32>
    %12 = vector.shape_cast %11 : vector<8x1x10x8xf32> to vector<8x10x8xf32>
    %13 = vector.extract_strided_slice %0 {offsets = [0, 2, 0, 0], sizes = [8, 1, 10, 8], strides = [1, 1, 1, 1]} : vector<8x4x10x10xf32> to vector<8x1x10x8xf32>
    %14 = vector.shape_cast %13 : vector<8x1x10x8xf32> to vector<8x10x8xf32>
    %15 = vector.extract_strided_slice %0 {offsets = [0, 2, 0, 1], sizes = [8, 1, 10, 8], strides = [1, 1, 1, 1]} : vector<8x4x10x10xf32> to vector<8x1x10x8xf32>
    %16 = vector.shape_cast %15 : vector<8x1x10x8xf32> to vector<8x10x8xf32>
    %17 = vector.extract_strided_slice %0 {offsets = [0, 2, 0, 2], sizes = [8, 1, 10, 8], strides = [1, 1, 1, 1]} : vector<8x4x10x10xf32> to vector<8x1x10x8xf32>
    %18 = vector.shape_cast %17 : vector<8x1x10x8xf32> to vector<8x10x8xf32>
    %19 = vector.extract_strided_slice %0 {offsets = [0, 3, 0, 0], sizes = [8, 1, 10, 8], strides = [1, 1, 1, 1]} : vector<8x4x10x10xf32> to vector<8x1x10x8xf32>
    %20 = vector.shape_cast %19 : vector<8x1x10x8xf32> to vector<8x10x8xf32>
    %21 = vector.extract_strided_slice %0 {offsets = [0, 3, 0, 1], sizes = [8, 1, 10, 8], strides = [1, 1, 1, 1]} : vector<8x4x10x10xf32> to vector<8x1x10x8xf32>
    %22 = vector.shape_cast %21 : vector<8x1x10x8xf32> to vector<8x10x8xf32>
    %23 = vector.extract_strided_slice %0 {offsets = [0, 3, 0, 2], sizes = [8, 1, 10, 8], strides = [1, 1, 1, 1]} : vector<8x4x10x10xf32> to vector<8x1x10x8xf32>
    %24 = vector.shape_cast %23 : vector<8x1x10x8xf32> to vector<8x10x8xf32>
    %cst = arith.constant 3.522620e-02 : f32
    %25 = vector.broadcast %cst : f32 to vector<8x10x8xf32>
    %26 = arith.mulf %25, %2 : vector<8x10x8xf32>
    %cst_3 = arith.constant -8.544120e-02 : f32
    %27 = vector.broadcast %cst_3 : f32 to vector<8x10x8xf32>
    %28 = arith.mulf %27, %8 : vector<8x10x8xf32>
    %29 = arith.addf %26, %28 : vector<8x10x8xf32>
    %cst_4 = arith.constant -1.350110e-01 : f32
    %30 = vector.broadcast %cst_4 : f32 to vector<8x10x8xf32>
    %31 = arith.mulf %30, %4 : vector<8x10x8xf32>
    %32 = arith.addf %29, %31 : vector<8x10x8xf32>
    %cst_5 = arith.constant 0.459877491 : f32
    %33 = vector.broadcast %cst_5 : f32 to vector<8x10x8xf32>
    %34 = arith.mulf %33, %10 : vector<8x10x8xf32>
    %35 = arith.addf %32, %34 : vector<8x10x8xf32>
    %cst_6 = arith.constant 0.8068915 : f32
    %36 = vector.broadcast %cst_6 : f32 to vector<8x10x8xf32>
    %37 = arith.mulf %36, %6 : vector<8x10x8xf32>
    %38 = arith.addf %35, %37 : vector<8x10x8xf32>
    %cst_7 = arith.constant 0.33267051 : f32
    %39 = vector.broadcast %cst_7 : f32 to vector<8x10x8xf32>
    %40 = arith.mulf %39, %12 : vector<8x10x8xf32>
    %41 = arith.addf %38, %40 : vector<8x10x8xf32>
    %cst_8 = arith.constant 3.522620e-02 : f32
    %42 = vector.broadcast %cst_8 : f32 to vector<8x10x8xf32>
    %43 = arith.mulf %42, %14 : vector<8x10x8xf32>
    %cst_9 = arith.constant -8.544120e-02 : f32
    %44 = vector.broadcast %cst_9 : f32 to vector<8x10x8xf32>
    %45 = arith.mulf %44, %20 : vector<8x10x8xf32>
    %46 = arith.addf %43, %45 : vector<8x10x8xf32>
    %cst_10 = arith.constant -1.350110e-01 : f32
    %47 = vector.broadcast %cst_10 : f32 to vector<8x10x8xf32>
    %48 = arith.mulf %47, %16 : vector<8x10x8xf32>
    %49 = arith.addf %46, %48 : vector<8x10x8xf32>
    %cst_11 = arith.constant 0.459877491 : f32
    %50 = vector.broadcast %cst_11 : f32 to vector<8x10x8xf32>
    %51 = arith.mulf %50, %22 : vector<8x10x8xf32>
    %52 = arith.addf %49, %51 : vector<8x10x8xf32>
    %cst_12 = arith.constant 0.8068915 : f32
    %53 = vector.broadcast %cst_12 : f32 to vector<8x10x8xf32>
    %54 = arith.mulf %53, %18 : vector<8x10x8xf32>
    %55 = arith.addf %52, %54 : vector<8x10x8xf32>
    %cst_13 = arith.constant 0.33267051 : f32
    %56 = vector.broadcast %cst_13 : f32 to vector<8x10x8xf32>
    %57 = arith.mulf %56, %24 : vector<8x10x8xf32>
    %58 = arith.addf %55, %57 : vector<8x10x8xf32>
    %cst_14 = arith.constant -0.33267051 : f32
    %59 = vector.broadcast %cst_14 : f32 to vector<8x10x8xf32>
    %60 = arith.mulf %59, %2 : vector<8x10x8xf32>
    %cst_15 = arith.constant 0.8068915 : f32
    %61 = vector.broadcast %cst_15 : f32 to vector<8x10x8xf32>
    %62 = arith.mulf %61, %8 : vector<8x10x8xf32>
    %63 = arith.addf %60, %62 : vector<8x10x8xf32>
    %cst_16 = arith.constant -0.459877491 : f32
    %64 = vector.broadcast %cst_16 : f32 to vector<8x10x8xf32>
    %65 = arith.mulf %64, %4 : vector<8x10x8xf32>
    %66 = arith.addf %63, %65 : vector<8x10x8xf32>
    %cst_17 = arith.constant -1.350110e-01 : f32
    %67 = vector.broadcast %cst_17 : f32 to vector<8x10x8xf32>
    %68 = arith.mulf %67, %10 : vector<8x10x8xf32>
    %69 = arith.addf %66, %68 : vector<8x10x8xf32>
    %cst_18 = arith.constant 8.544120e-02 : f32
    %70 = vector.broadcast %cst_18 : f32 to vector<8x10x8xf32>
    %71 = arith.mulf %70, %6 : vector<8x10x8xf32>
    %72 = arith.addf %69, %71 : vector<8x10x8xf32>
    %cst_19 = arith.constant 3.522620e-02 : f32
    %73 = vector.broadcast %cst_19 : f32 to vector<8x10x8xf32>
    %74 = arith.mulf %73, %12 : vector<8x10x8xf32>
    %75 = arith.addf %72, %74 : vector<8x10x8xf32>
    %cst_20 = arith.constant -0.33267051 : f32
    %76 = vector.broadcast %cst_20 : f32 to vector<8x10x8xf32>
    %77 = arith.mulf %76, %14 : vector<8x10x8xf32>
    %cst_21 = arith.constant 0.8068915 : f32
    %78 = vector.broadcast %cst_21 : f32 to vector<8x10x8xf32>
    %79 = arith.mulf %78, %20 : vector<8x10x8xf32>
    %80 = arith.addf %77, %79 : vector<8x10x8xf32>
    %cst_22 = arith.constant -0.459877491 : f32
    %81 = vector.broadcast %cst_22 : f32 to vector<8x10x8xf32>
    %82 = arith.mulf %81, %16 : vector<8x10x8xf32>
    %83 = arith.addf %80, %82 : vector<8x10x8xf32>
    %cst_23 = arith.constant -1.350110e-01 : f32
    %84 = vector.broadcast %cst_23 : f32 to vector<8x10x8xf32>
    %85 = arith.mulf %84, %22 : vector<8x10x8xf32>
    %86 = arith.addf %83, %85 : vector<8x10x8xf32>
    %cst_24 = arith.constant 8.544120e-02 : f32
    %87 = vector.broadcast %cst_24 : f32 to vector<8x10x8xf32>
    %88 = arith.mulf %87, %18 : vector<8x10x8xf32>
    %89 = arith.addf %86, %88 : vector<8x10x8xf32>
    %cst_25 = arith.constant 3.522620e-02 : f32
    %90 = vector.broadcast %cst_25 : f32 to vector<8x10x8xf32>
    %91 = arith.mulf %90, %24 : vector<8x10x8xf32>
    %92 = arith.addf %89, %91 : vector<8x10x8xf32>
    %93 = vector.extract_strided_slice %41 {offsets = [0, 0, 0], sizes = [8, 8, 8], strides = [1, 1, 1]} : vector<8x10x8xf32> to vector<8x8x8xf32>
    %94 = vector.extract_strided_slice %41 {offsets = [0, 1, 0], sizes = [8, 8, 8], strides = [1, 1, 1]} : vector<8x10x8xf32> to vector<8x8x8xf32>
    %95 = vector.extract_strided_slice %41 {offsets = [0, 2, 0], sizes = [8, 8, 8], strides = [1, 1, 1]} : vector<8x10x8xf32> to vector<8x8x8xf32>
    %96 = vector.extract_strided_slice %58 {offsets = [0, 0, 0], sizes = [8, 8, 8], strides = [1, 1, 1]} : vector<8x10x8xf32> to vector<8x8x8xf32>
    %97 = vector.extract_strided_slice %58 {offsets = [0, 1, 0], sizes = [8, 8, 8], strides = [1, 1, 1]} : vector<8x10x8xf32> to vector<8x8x8xf32>
    %98 = vector.extract_strided_slice %58 {offsets = [0, 2, 0], sizes = [8, 8, 8], strides = [1, 1, 1]} : vector<8x10x8xf32> to vector<8x8x8xf32>
    %99 = vector.extract_strided_slice %75 {offsets = [0, 0, 0], sizes = [8, 8, 8], strides = [1, 1, 1]} : vector<8x10x8xf32> to vector<8x8x8xf32>
    %100 = vector.extract_strided_slice %75 {offsets = [0, 1, 0], sizes = [8, 8, 8], strides = [1, 1, 1]} : vector<8x10x8xf32> to vector<8x8x8xf32>
    %101 = vector.extract_strided_slice %75 {offsets = [0, 2, 0], sizes = [8, 8, 8], strides = [1, 1, 1]} : vector<8x10x8xf32> to vector<8x8x8xf32>
    %102 = vector.extract_strided_slice %92 {offsets = [0, 0, 0], sizes = [8, 8, 8], strides = [1, 1, 1]} : vector<8x10x8xf32> to vector<8x8x8xf32>
    %103 = vector.extract_strided_slice %92 {offsets = [0, 1, 0], sizes = [8, 8, 8], strides = [1, 1, 1]} : vector<8x10x8xf32> to vector<8x8x8xf32>
    %104 = vector.extract_strided_slice %92 {offsets = [0, 2, 0], sizes = [8, 8, 8], strides = [1, 1, 1]} : vector<8x10x8xf32> to vector<8x8x8xf32>
    %cst_26 = arith.constant 3.522620e-02 : f32
    %105 = vector.broadcast %cst_26 : f32 to vector<8x8x8xf32>
    %106 = arith.mulf %105, %93 : vector<8x8x8xf32>
    %cst_27 = arith.constant -8.544120e-02 : f32
    %107 = vector.broadcast %cst_27 : f32 to vector<8x8x8xf32>
    %108 = arith.mulf %107, %96 : vector<8x8x8xf32>
    %109 = arith.addf %106, %108 : vector<8x8x8xf32>
    %cst_28 = arith.constant -1.350110e-01 : f32
    %110 = vector.broadcast %cst_28 : f32 to vector<8x8x8xf32>
    %111 = arith.mulf %110, %94 : vector<8x8x8xf32>
    %112 = arith.addf %109, %111 : vector<8x8x8xf32>
    %cst_29 = arith.constant 0.459877491 : f32
    %113 = vector.broadcast %cst_29 : f32 to vector<8x8x8xf32>
    %114 = arith.mulf %113, %97 : vector<8x8x8xf32>
    %115 = arith.addf %112, %114 : vector<8x8x8xf32>
    %cst_30 = arith.constant 0.8068915 : f32
    %116 = vector.broadcast %cst_30 : f32 to vector<8x8x8xf32>
    %117 = arith.mulf %116, %95 : vector<8x8x8xf32>
    %118 = arith.addf %115, %117 : vector<8x8x8xf32>
    %cst_31 = arith.constant 0.33267051 : f32
    %119 = vector.broadcast %cst_31 : f32 to vector<8x8x8xf32>
    %120 = arith.mulf %119, %98 : vector<8x8x8xf32>
    %121 = arith.addf %118, %120 : vector<8x8x8xf32>
    %c0_32 = arith.constant 0 : index
    %c0_33 = arith.constant 0 : index
    %c0_34 = arith.constant 0 : index
    %c0_35 = arith.constant 0 : index
    %122 = vector.load %arg2[%c0_32, %c0_33, %c0_34, %c0_35] : memref<8x4x8x8xf32, #tpu.memory_space<vmem>>, vector<8x1x8x8xf32>
    %123 = vector.shape_cast %122 : vector<8x1x8x8xf32> to vector<8x8x8xf32>
    %124 = vector.shape_cast %121 : vector<8x8x8xf32> to vector<8x1x8x8xf32>
    tpu.vector_store %arg2[%c0_32, %c0_33, %c0_34, %c0_35], %124 {strides = array<i32>} : memref<8x4x8x8xf32, #tpu.memory_space<vmem>>, vector<8x1x8x8xf32>,
    %cst_36 = arith.constant 3.522620e-02 : f32
    %125 = vector.broadcast %cst_36 : f32 to vector<8x8x8xf32>
    %126 = arith.mulf %125, %99 : vector<8x8x8xf32>
    %cst_37 = arith.constant -8.544120e-02 : f32
    %127 = vector.broadcast %cst_37 : f32 to vector<8x8x8xf32>
    %128 = arith.mulf %127, %102 : vector<8x8x8xf32>
    %129 = arith.addf %126, %128 : vector<8x8x8xf32>
    %cst_38 = arith.constant -1.350110e-01 : f32
    %130 = vector.broadcast %cst_38 : f32 to vector<8x8x8xf32>
    %131 = arith.mulf %130, %100 : vector<8x8x8xf32>
    %132 = arith.addf %129, %131 : vector<8x8x8xf32>
    %cst_39 = arith.constant 0.459877491 : f32
    %133 = vector.broadcast %cst_39 : f32 to vector<8x8x8xf32>
    %134 = arith.mulf %133, %103 : vector<8x8x8xf32>
    %135 = arith.addf %132, %134 : vector<8x8x8xf32>
    %cst_40 = arith.constant 0.8068915 : f32
    %136 = vector.broadcast %cst_40 : f32 to vector<8x8x8xf32>
    %137 = arith.mulf %136, %101 : vector<8x8x8xf32>
    %138 = arith.addf %135, %137 : vector<8x8x8xf32>
    %cst_41 = arith.constant 0.33267051 : f32
    %139 = vector.broadcast %cst_41 : f32 to vector<8x8x8xf32>
    %140 = arith.mulf %139, %104 : vector<8x8x8xf32>
    %141 = arith.addf %138, %140 : vector<8x8x8xf32>
    %c0_42 = arith.constant 0 : index
    %c1 = arith.constant 1 : index
    %c0_43 = arith.constant 0 : index
    %c0_44 = arith.constant 0 : index
    %142 = vector.load %arg2[%c0_42, %c1, %c0_43, %c0_44] : memref<8x4x8x8xf32, #tpu.memory_space<vmem>>, vector<8x1x8x8xf32>
    %143 = vector.shape_cast %142 : vector<8x1x8x8xf32> to vector<8x8x8xf32>
    %144 = vector.shape_cast %141 : vector<8x8x8xf32> to vector<8x1x8x8xf32>
    tpu.vector_store %arg2[%c0_42, %c1, %c0_43, %c0_44], %144 {strides = array<i32>} : memref<8x4x8x8xf32, #tpu.memory_space<vmem>>, vector<8x1x8x8xf32>,
    %cst_45 = arith.constant -0.33267051 : f32
    %145 = vector.broadcast %cst_45 : f32 to vector<8x8x8xf32>
    %146 = arith.mulf %145, %93 : vector<8x8x8xf32>
    %cst_46 = arith.constant 0.8068915 : f32
    %147 = vector.broadcast %cst_46 : f32 to vector<8x8x8xf32>
    %148 = arith.mulf %147, %96 : vector<8x8x8xf32>
    %149 = arith.addf %146, %148 : vector<8x8x8xf32>
    %cst_47 = arith.constant -0.459877491 : f32
    %150 = vector.broadcast %cst_47 : f32 to vector<8x8x8xf32>
    %151 = arith.mulf %150, %94 : vector<8x8x8xf32>
    %152 = arith.addf %149, %151 : vector<8x8x8xf32>
    %cst_48 = arith.constant -1.350110e-01 : f32
    %153 = vector.broadcast %cst_48 : f32 to vector<8x8x8xf32>
    %154 = arith.mulf %153, %97 : vector<8x8x8xf32>
    %155 = arith.addf %152, %154 : vector<8x8x8xf32>
    %cst_49 = arith.constant 8.544120e-02 : f32
    %156 = vector.broadcast %cst_49 : f32 to vector<8x8x8xf32>
    %157 = arith.mulf %156, %95 : vector<8x8x8xf32>
    %158 = arith.addf %155, %157 : vector<8x8x8xf32>
    %cst_50 = arith.constant 3.522620e-02 : f32
    %159 = vector.broadcast %cst_50 : f32 to vector<8x8x8xf32>
    %160 = arith.mulf %159, %98 : vector<8x8x8xf32>
    %161 = arith.addf %158, %160 : vector<8x8x8xf32>
    %c0_51 = arith.constant 0 : index
    %c2 = arith.constant 2 : index
    %c0_52 = arith.constant 0 : index
    %c0_53 = arith.constant 0 : index
    %162 = vector.load %arg2[%c0_51, %c2, %c0_52, %c0_53] : memref<8x4x8x8xf32, #tpu.memory_space<vmem>>, vector<8x1x8x8xf32>
    %163 = vector.shape_cast %162 : vector<8x1x8x8xf32> to vector<8x8x8xf32>
    %164 = vector.shape_cast %161 : vector<8x8x8xf32> to vector<8x1x8x8xf32>
    tpu.vector_store %arg2[%c0_51, %c2, %c0_52, %c0_53], %164 {strides = array<i32>} : memref<8x4x8x8xf32, #tpu.memory_space<vmem>>, vector<8x1x8x8xf32>,
    %cst_54 = arith.constant -0.33267051 : f32
    %165 = vector.broadcast %cst_54 : f32 to vector<8x8x8xf32>
    %166 = arith.mulf %165, %99 : vector<8x8x8xf32>
    %cst_55 = arith.constant 0.8068915 : f32
    %167 = vector.broadcast %cst_55 : f32 to vector<8x8x8xf32>
    %168 = arith.mulf %167, %102 : vector<8x8x8xf32>
    %169 = arith.addf %166, %168 : vector<8x8x8xf32>
    %cst_56 = arith.constant -0.459877491 : f32
    %170 = vector.broadcast %cst_56 : f32 to vector<8x8x8xf32>
    %171 = arith.mulf %170, %100 : vector<8x8x8xf32>
    %172 = arith.addf %169, %171 : vector<8x8x8xf32>
    %cst_57 = arith.constant -1.350110e-01 : f32
    %173 = vector.broadcast %cst_57 : f32 to vector<8x8x8xf32>
    %174 = arith.mulf %173, %103 : vector<8x8x8xf32>
    %175 = arith.addf %172, %174 : vector<8x8x8xf32>
    %cst_58 = arith.constant 8.544120e-02 : f32
    %176 = vector.broadcast %cst_58 : f32 to vector<8x8x8xf32>
    %177 = arith.mulf %176, %101 : vector<8x8x8xf32>
    %178 = arith.addf %175, %177 : vector<8x8x8xf32>
    %cst_59 = arith.constant 3.522620e-02 : f32
    %179 = vector.broadcast %cst_59 : f32 to vector<8x8x8xf32>
    %180 = arith.mulf %179, %104 : vector<8x8x8xf32>
    %181 = arith.addf %178, %180 : vector<8x8x8xf32>
    %c0_60 = arith.constant 0 : index
    %c3 = arith.constant 3 : index
    %c0_61 = arith.constant 0 : index
    %c0_62 = arith.constant 0 : index
    %182 = vector.load %arg2[%c0_60, %c3, %c0_61, %c0_62] : memref<8x4x8x8xf32, #tpu.memory_space<vmem>>, vector<8x1x8x8xf32>
    %183 = vector.shape_cast %182 : vector<8x1x8x8xf32> to vector<8x8x8xf32>
    %184 = vector.shape_cast %181 : vector<8x8x8xf32> to vector<8x1x8x8xf32>
    tpu.vector_store %arg2[%c0_60, %c3, %c0_61, %c0_62], %184 {strides = array<i32>} : memref<8x4x8x8xf32, #tpu.memory_space<vmem>>, vector<8x1x8x8xf32>,
    return
  }
  func.func @transform_0(%arg0: i32) -> (i32, i32, i32, i32) {
    %c0_i32 = arith.constant 0 : i32
    %c0_i32_0 = arith.constant 0 : i32
    %c0_i32_1 = arith.constant 0 : i32
    %c0_i32_2 = arith.constant 0 : i32
    return %arg0, %c0_i32, %c0_i32_0, %c0_i32_1 : i32, i32, i32, i32
  }
  func.func @transform_1(%arg0: i32) -> (i32, i32, i32, i32) {
    %c0_i32 = arith.constant 0 : i32
    %c0_i32_0 = arith.constant 0 : i32
    %c0_i32_1 = arith.constant 0 : i32
    %c0_i32_2 = arith.constant 0 : i32
    return %arg0, %c0_i32, %c0_i32_0, %c0_i32_1 : i32, i32, i32, i32
  }
}

</mosaic_0001>

<llo_original>
// kernel: tpu_custom_call.1
$region0: #{tpu_custom_call.1}
  #allocation0 [shape = 'u32[]', space=smem, size = 0x4, offset = 0x4, fixed_abs, tag = 'smem constant byte address 0x4 - core index']
  #allocation1 [shape = 'u32[144,128]{1,0:T(1,128)}', space=vmem, size = 0x12000, scoped, tag = 'internal scratch']
  %s0 = inlined_call_operand.vmem [shape: f32[8,4,10,10], index: 0, kind: input, shape index: {}]
  %s1 = inlined_call_operand.hbm [shape: f32[8,4,8,8], index: 1, kind: output, shape index: {}]
  %s2 = sld [smem:[#allocation0]]
  $region14: #{tpu_custom_call.1} parent=0
    _
  %s4 = ssub.s32 1, %s2
  %s5 = scalar_select 0, %s4, %s2
  $region1: #{tpu_custom_call.1} parent=0
    #allocation2 [shape = 'u8[131072]{0}', space=vmem, size = 0x20000, scoped, tag = 'output window, operand 0, single buffered']
    #allocation3 [shape = 's32[1]{0}', space=sflag, size = 0x4, scoped, tag = 'scoped memory for tpu_custom_call.1']
    %6 = vsyncpa [#allocation3], 0
    // Predicated region
    $region2: #{tpu_custom_call.1} parent=1 // pred_check
      _
    $region3: #{tpu_custom_call.1} parent=1 // pred_check_branch
      %8 = sbr.rel (0) target = $region5
    $region4: #{tpu_custom_call.1} parent=1 // pred_region
      _
    $region5: #{tpu_custom_call.1} parent=1 // pred_fallthru
      _
    %v9 = vld [vmem:[%s0] sm:$0xff]
    %v10 = vld [vmem:[%s0 + $0x8] sm:$0x3]
    %v11 = vld [vmem:[%s0 + $0x10] sm:$0xff]
    %v12 = vld [vmem:[%s0 + $0x18] sm:$0x3]
    %v13 = vld [vmem:[%s0 + $0x20] sm:$0xff]
    %v14 = vld [vmem:[%s0 + $0x28] sm:$0x3]
    %v15 = vld [vmem:[%s0 + $0x30] sm:$0xff]
    %v16 = vld [vmem:[%s0 + $0x38] sm:$0x3]
    %v17 = vld [vmem:[%s0 + $0x40] sm:$0xff]
    %v18 = vld [vmem:[%s0 + $0x48] sm:$0x3]
    %v19 = vld [vmem:[%s0 + $0x50] sm:$0xff]
    %v20 = vld [vmem:[%s0 + $0x58] sm:$0x3]
    %v21 = vld [vmem:[%s0 + $0x60] sm:$0xff]
    %v22 = vld [vmem:[%s0 + $0x68] sm:$0x3]
    %v23 = vld [vmem:[%s0 + $0x70] sm:$0xff]
    %v24 = vld [vmem:[%s0 + $0x78] sm:$0x3]
    %v25 = vld [vmem:[%s0 + $0x80] sm:$0xff]
    %v26 = vld [vmem:[%s0 + $0x88] sm:$0x3]
    %v27 = vld [vmem:[%s0 + $0x90] sm:$0xff]
    %v28 = vld [vmem:[%s0 + $0x98] sm:$0x3]
    %v29 = vld [vmem:[%s0 + $0xa0] sm:$0xff]
    %v30 = vld [vmem:[%s0 + $0xa8] sm:$0x3]
    %v31 = vld [vmem:[%s0 + $0xb0] sm:$0xff]
    %v32 = vld [vmem:[%s0 + $0xb8] sm:$0x3]
    %v33 = vld [vmem:[%s0 + $0xc0] sm:$0xff]
    %v34 = vld [vmem:[%s0 + $0xc8] sm:$0x3]
    %v35 = vld [vmem:[%s0 + $0xd0] sm:$0xff]
    %v36 = vld [vmem:[%s0 + $0xd8] sm:$0x3]
    %v37 = vld [vmem:[%s0 + $0xe0] sm:$0xff]
    %v38 = vld [vmem:[%s0 + $0xe8] sm:$0x3]
    %v39 = vld [vmem:[%s0 + $0xf0] sm:$0xff]
    %v40 = vld [vmem:[%s0 + $0xf8] sm:$0x3]
    %v41 = vld [vmem:[%s0 + $0x100] sm:$0xff]
    %v42 = vld [vmem:[%s0 + $0x108] sm:$0x3]
    %v43 = vld [vmem:[%s0 + $0x110] sm:$0xff]
    %v44 = vld [vmem:[%s0 + $0x118] sm:$0x3]
    %v45 = vld [vmem:[%s0 + $0x120] sm:$0xff]
    %v46 = vld [vmem:[%s0 + $0x128] sm:$0x3]
    %v47 = vld [vmem:[%s0 + $0x130] sm:$0xff]
    %v48 = vld [vmem:[%s0 + $0x138] sm:$0x3]
    %v49 = vld [vmem:[%s0 + $0x140] sm:$0xff]
    %v50 = vld [vmem:[%s0 + $0x148] sm:$0x3]
    %v51 = vld [vmem:[%s0 + $0x150] sm:$0xff]
    %v52 = vld [vmem:[%s0 + $0x158] sm:$0x3]
    %v53 = vld [vmem:[%s0 + $0x160] sm:$0xff]
    %v54 = vld [vmem:[%s0 + $0x168] sm:$0x3]
    %v55 = vld [vmem:[%s0 + $0x170] sm:$0xff]
    %v56 = vld [vmem:[%s0 + $0x178] sm:$0x3]
    %v57 = vld [vmem:[%s0 + $0x180] sm:$0xff]
    %v58 = vld [vmem:[%s0 + $0x188] sm:$0x3]
    %v59 = vld [vmem:[%s0 + $0x190] sm:$0xff]
    %v60 = vld [vmem:[%s0 + $0x198] sm:$0x3]
    %v61 = vld [vmem:[%s0 + $0x1a0] sm:$0xff]
    %v62 = vld [vmem:[%s0 + $0x1a8] sm:$0x3]
    %v63 = vld [vmem:[%s0 + $0x1b0] sm:$0xff]
    %v64 = vld [vmem:[%s0 + $0x1b8] sm:$0x3]
    %v65 = vld [vmem:[%s0 + $0x1c0] sm:$0xff]
    %v66 = vld [vmem:[%s0 + $0x1c8] sm:$0x3]
    %v67 = vld [vmem:[%s0 + $0x1d0] sm:$0xff]
    %v68 = vld [vmem:[%s0 + $0x1d8] sm:$0x3]
    %v69 = vld [vmem:[%s0 + $0x1e0] sm:$0xff]
    %v70 = vld [vmem:[%s0 + $0x1e8] sm:$0x3]
    %v71 = vld [vmem:[%s0 + $0x1f0] sm:$0xff]
    %v72 = vld [vmem:[%s0 + $0x1f8] sm:$0x3]
    %v73 = vmul.f32 %v9, 0.0352262
    %v74 = vmul.f32 %v10, 0.0352262
    %v75 = vmul.f32 %v17, 0.0352262
    %v76 = vmul.f32 %v18, 0.0352262
    %v77 = vmul.f32 %v25, 0.0352262
    %v78 = vmul.f32 %v26, 0.0352262
    %v79 = vmul.f32 %v33, 0.0352262
    %v80 = vmul.f32 %v34, 0.0352262
    %v81 = vmul.f32 %v41, 0.0352262
    %v82 = vmul.f32 %v42, 0.0352262
    %v83 = vmul.f32 %v49, 0.0352262
    %v84 = vmul.f32 %v50, 0.0352262
    %v85 = vmul.f32 %v57, 0.0352262
    %v86 = vmul.f32 %v58, 0.0352262
    %v87 = vmul.f32 %v65, 0.0352262
    %v88 = vmul.f32 %v66, 0.0352262
    %v89 = vmul.f32 %v11, -0.0854412
    %v90 = vmul.f32 %v12, -0.0854412
    %v91 = vmul.f32 %v19, -0.0854412
    %v92 = vmul.f32 %v20, -0.0854412
    %v93 = vmul.f32 %v27, -0.0854412
    %v94 = vmul.f32 %v28, -0.0854412
    %v95 = vmul.f32 %v35, -0.0854412
    %v96 = vmul.f32 %v36, -0.0854412
    %v97 = vmul.f32 %v43, -0.0854412
    %v98 = vmul.f32 %v44, -0.0854412
    %v99 = vmul.f32 %v51, -0.0854412
    %v100 = vmul.f32 %v52, -0.0854412
    %v101 = vmul.f32 %v59, -0.0854412
    %v102 = vmul.f32 %v60, -0.0854412
    %v103 = vmul.f32 %v67, -0.0854412
    %v104 = vmul.f32 %v68, -0.0854412
    %v105 = vadd.f32 %v73, %v89
    %v106 = vadd.f32 %v74, %v90
    %v107 = vadd.f32 %v75, %v91
    %v108 = vadd.f32 %v76, %v92
    %v109 = vadd.f32 %v77, %v93
    %v110 = vadd.f32 %v78, %v94
    %v111 = vadd.f32 %v79, %v95
    %v112 = vadd.f32 %v80, %v96
    %v113 = vadd.f32 %v81, %v97
    %v114 = vadd.f32 %v82, %v98
    %v115 = vadd.f32 %v83, %v99
    %v116 = vadd.f32 %v84, %v100
    %v117 = vadd.f32 %v85, %v101
    %v118 = vadd.f32 %v86, %v102
    %v119 = vadd.f32 %v87, %v103
    %v120 = vadd.f32 %v88, %v104
    %v121 = vmul.f32 %v9, -0.135011
    %v122 = vmul.f32 %v10, -0.135011
    %v123 = vmul.f32 %v17, -0.135011
    %v124 = vmul.f32 %v18, -0.135011
    %v125 = vmul.f32 %v25, -0.135011
    %v126 = vmul.f32 %v26, -0.135011
    %v127 = vmul.f32 %v33, -0.135011
    %v128 = vmul.f32 %v34, -0.135011
    %v129 = vmul.f32 %v41, -0.135011
    %v130 = vmul.f32 %v42, -0.135011
    %v131 = vmul.f32 %v49, -0.135011
    %v132 = vmul.f32 %v50, -0.135011
    %v133 = vmul.f32 %v57, -0.135011
    %v134 = vmul.f32 %v58, -0.135011
    %v135 = vmul.f32 %v65, -0.135011
    %v136 = vmul.f32 %v66, -0.135011
    %153 = vrot.lane.b32.xlu0 %v121, 127
    %v154 = vpop.permute.xlu0 %153
    %155 = vrot.lane.b32.xlu0 %v122, 127
    %v156 = vpop.permute.xlu0 %155
    %157 = vrot.lane.b32.xlu0 %v123, 127
    %v158 = vpop.permute.xlu0 %157
    %159 = vrot.lane.b32.xlu0 %v124, 127
    %v160 = vpop.permute.xlu0 %159
    %161 = vrot.lane.b32.xlu0 %v125, 127
    %v162 = vpop.permute.xlu0 %161
    %163 = vrot.lane.b32.xlu0 %v126, 127
    %v164 = vpop.permute.xlu0 %163
    %165 = vrot.lane.b32.xlu0 %v127, 127
    %v166 = vpop.permute.xlu0 %165
    %167 = vrot.lane.b32.xlu0 %v128, 127
    %v168 = vpop.permute.xlu0 %167
    %169 = vrot.lane.b32.xlu0 %v129, 127
    %v170 = vpop.permute.xlu0 %169
    %171 = vrot.lane.b32.xlu0 %v130, 127
    %v172 = vpop.permute.xlu0 %171
    %173 = vrot.lane.b32.xlu0 %v131, 127
    %v174 = vpop.permute.xlu0 %173
    %175 = vrot.lane.b32.xlu0 %v132, 127
    %v176 = vpop.permute.xlu0 %175
    %177 = vrot.lane.b32.xlu0 %v133, 127
    %v178 = vpop.permute.xlu0 %177
    %179 = vrot.lane.b32.xlu0 %v134, 127
    %v180 = vpop.permute.xlu0 %179
    %181 = vrot.lane.b32.xlu0 %v135, 127
    %v182 = vpop.permute.xlu0 %181
    %183 = vrot.lane.b32.xlu0 %v136, 127
    %v184 = vpop.permute.xlu0 %183
    %v201 = vadd.f32 %v105, %v154
    %v202 = vadd.f32 %v106, %v156
    %v203 = vadd.f32 %v107, %v158
    %v204 = vadd.f32 %v108, %v160
    %v205 = vadd.f32 %v109, %v162
    %v206 = vadd.f32 %v110, %v164
    %v207 = vadd.f32 %v111, %v166
    %v208 = vadd.f32 %v112, %v168
    %v209 = vadd.f32 %v113, %v170
    %v210 = vadd.f32 %v114, %v172
    %v211 = vadd.f32 %v115, %v174
    %v212 = vadd.f32 %v116, %v176
    %v213 = vadd.f32 %v117, %v178
    %v214 = vadd.f32 %v118, %v180
    %v215 = vadd.f32 %v119, %v182
    %v216 = vadd.f32 %v120, %v184
    %v217 = vmul.f32 %v11, 0.4598775
    %v218 = vmul.f32 %v12, 0.4598775
    %v219 = vmul.f32 %v19, 0.4598775
    %v220 = vmul.f32 %v20, 0.4598775
    %v221 = vmul.f32 %v27, 0.4598775
    %v222 = vmul.f32 %v28, 0.4598775
    %v223 = vmul.f32 %v35, 0.4598775
    %v224 = vmul.f32 %v36, 0.4598775
    %v225 = vmul.f32 %v43, 0.4598775
    %v226 = vmul.f32 %v44, 0.4598775
    %v227 = vmul.f32 %v51, 0.4598775
    %v228 = vmul.f32 %v52, 0.4598775
    %v229 = vmul.f32 %v59, 0.4598775
    %v230 = vmul.f32 %v60, 0.4598775
    %v231 = vmul.f32 %v67, 0.4598775
    %v232 = vmul.f32 %v68, 0.4598775
    %249 = vrot.lane.b32.xlu0 %v217, 127
    %v250 = vpop.permute.xlu0 %249
    %251 = vrot.lane.b32.xlu0 %v218, 127
    %v252 = vpop.permute.xlu0 %251
    %253 = vrot.lane.b32.xlu0 %v219, 127
    %v254 = vpop.permute.xlu0 %253
    %255 = vrot.lane.b32.xlu0 %v220, 127
    %v256 = vpop.permute.xlu0 %255
    %257 = vrot.lane.b32.xlu0 %v221, 127
    %v258 = vpop.permute.xlu0 %257
    %259 = vrot.lane.b32.xlu0 %v222, 127
    %v260 = vpop.permute.xlu0 %259
    %261 = vrot.lane.b32.xlu0 %v223, 127
    %v262 = vpop.permute.xlu0 %261
    %263 = vrot.lane.b32.xlu0 %v224, 127
    %v264 = vpop.permute.xlu0 %263
    %265 = vrot.lane.b32.xlu0 %v225, 127
    %v266 = vpop.permute.xlu0 %265
    %267 = vrot.lane.b32.xlu0 %v226, 127
    %v268 = vpop.permute.xlu0 %267
    %269 = vrot.lane.b32.xlu0 %v227, 127
    %v270 = vpop.permute.xlu0 %269
    %271 = vrot.lane.b32.xlu0 %v228, 127
    %v272 = vpop.permute.xlu0 %271
    %273 = vrot.lane.b32.xlu0 %v229, 127
    %v274 = vpop.permute.xlu0 %273
    %275 = vrot.lane.b32.xlu0 %v230, 127
    %v276 = vpop.permute.xlu0 %275
    %277 = vrot.lane.b32.xlu0 %v231, 127
    %v278 = vpop.permute.xlu0 %277
    %279 = vrot.lane.b32.xlu0 %v232, 127
    %v280 = vpop.permute.xlu0 %279
    %v297 = vadd.f32 %v201, %v250
    %v298 = vadd.f32 %v202, %v252
    %v299 = vadd.f32 %v203, %v254
    %v300 = vadd.f32 %v204, %v256
    %v301 = vadd.f32 %v205, %v258
    %v302 = vadd.f32 %v206, %v260
    %v303 = vadd.f32 %v207, %v262
    %v304 = vadd.f32 %v208, %v264
    %v305 = vadd.f32 %v209, %v266
    %v306 = vadd.f32 %v210, %v268
    %v307 = vadd.f32 %v211, %v270
    %v308 = vadd.f32 %v212, %v272
    %v309 = vadd.f32 %v213, %v274
    %v310 = vadd.f32 %v214, %v276
    %v311 = vadd.f32 %v215, %v278
    %v312 = vadd.f32 %v216, %v280
    %v313 = vmul.f32 %v9, 0.8068915
    %v314 = vmul.f32 %v10, 0.8068915
    %v315 = vmul.f32 %v17, 0.8068915
    %v316 = vmul.f32 %v18, 0.8068915
    %v317 = vmul.f32 %v25, 0.8068915
    %v318 = vmul.f32 %v26, 0.8068915
    %v319 = vmul.f32 %v33, 0.8068915
    %v320 = vmul.f32 %v34, 0.8068915
    %v321 = vmul.f32 %v41, 0.8068915
    %v322 = vmul.f32 %v42, 0.8068915
    %v323 = vmul.f32 %v49, 0.8068915
    %v324 = vmul.f32 %v50, 0.8068915
    %v325 = vmul.f32 %v57, 0.8068915
    %v326 = vmul.f32 %v58, 0.8068915
    %v327 = vmul.f32 %v65, 0.8068915
    %v328 = vmul.f32 %v66, 0.8068915
    %345 = vrot.lane.b32.xlu0 %v313, 126
    %v346 = vpop.permute.xlu0 %345
    %347 = vrot.lane.b32.xlu0 %v314, 126
    %v348 = vpop.permute.xlu0 %347
    %349 = vrot.lane.b32.xlu0 %v315, 126
    %v350 = vpop.permute.xlu0 %349
    %351 = vrot.lane.b32.xlu0 %v316, 126
    %v352 = vpop.permute.xlu0 %351
    %353 = vrot.lane.b32.xlu0 %v317, 126
    %v354 = vpop.permute.xlu0 %353
    %355 = vrot.lane.b32.xlu0 %v318, 126
    %v356 = vpop.permute.xlu0 %355
    %357 = vrot.lane.b32.xlu0 %v319, 126
    %v358 = vpop.permute.xlu0 %357
    %359 = vrot.lane.b32.xlu0 %v320, 126
    %v360 = vpop.permute.xlu0 %359
    %361 = vrot.lane.b32.xlu0 %v321, 126
    %v362 = vpop.permute.xlu0 %361
    %363 = vrot.lane.b32.xlu0 %v322, 126
    %v364 = vpop.permute.xlu0 %363
    %365 = vrot.lane.b32.xlu0 %v323, 126
    %v366 = vpop.permute.xlu0 %365
    %367 = vrot.lane.b32.xlu0 %v324, 126
    %v368 = vpop.permute.xlu0 %367
    %369 = vrot.lane.b32.xlu0 %v325, 126
    %v370 = vpop.permute.xlu0 %369
    %371 = vrot.lane.b32.xlu0 %v326, 126
    %v372 = vpop.permute.xlu0 %371
    %373 = vrot.lane.b32.xlu0 %v327, 126
    %v374 = vpop.permute.xlu0 %373
    %375 = vrot.lane.b32.xlu0 %v328, 126
    %v376 = vpop.permute.xlu0 %375
    %v393 = vadd.f32 %v297, %v346
    %v394 = vadd.f32 %v298, %v348
    %v395 = vadd.f32 %v299, %v350
    %v396 = vadd.f32 %v300, %v352
    %v397 = vadd.f32 %v301, %v354
    %v398 = vadd.f32 %v302, %v356
    %v399 = vadd.f32 %v303, %v358
    %v400 = vadd.f32 %v304, %v360
    %v401 = vadd.f32 %v305, %v362
    %v402 = vadd.f32 %v306, %v364
    %v403 = vadd.f32 %v307, %v366
    %v404 = vadd.f32 %v308, %v368
    %v405 = vadd.f32 %v309, %v370
    %v406 = vadd.f32 %v310, %v372
    %v407 = vadd.f32 %v311, %v374
    %v408 = vadd.f32 %v312, %v376
    %v409 = vmul.f32 %v11, 0.3326705
    %v410 = vmul.f32 %v12, 0.3326705
    %v411 = vmul.f32 %v19, 0.3326705
    %v412 = vmul.f32 %v20, 0.3326705
    %v413 = vmul.f32 %v27, 0.3326705
    %v414 = vmul.f32 %v28, 0.3326705
    %v415 = vmul.f32 %v35, 0.3326705
    %v416 = vmul.f32 %v36, 0.3326705
    %v417 = vmul.f32 %v43, 0.3326705
    %v418 = vmul.f32 %v44, 0.3326705
    %v419 = vmul.f32 %v51, 0.3326705
    %v420 = vmul.f32 %v52, 0.3326705
    %v421 = vmul.f32 %v59, 0.3326705
    %v422 = vmul.f32 %v60, 0.3326705
    %v423 = vmul.f32 %v67, 0.3326705
    %v424 = vmul.f32 %v68, 0.3326705
    %441 = vrot.lane.b32.xlu0 %v409, 126
    %v442 = vpop.permute.xlu0 %441
    %443 = vrot.lane.b32.xlu0 %v410, 126
    %v444 = vpop.permute.xlu0 %443
    %445 = vrot.lane.b32.xlu0 %v411, 126
    %v446 = vpop.permute.xlu0 %445
    %447 = vrot.lane.b32.xlu0 %v412, 126
    %v448 = vpop.permute.xlu0 %447
    %449 = vrot.lane.b32.xlu0 %v413, 126
    %v450 = vpop.permute.xlu0 %449
    %451 = vrot.lane.b32.xlu0 %v414, 126
    %v452 = vpop.permute.xlu0 %451
    %453 = vrot.lane.b32.xlu0 %v415, 126
    %v454 = vpop.permute.xlu0 %453
    %455 = vrot.lane.b32.xlu0 %v416, 126
    %v456 = vpop.permute.xlu0 %455
    %457 = vrot.lane.b32.xlu0 %v417, 126
    %v458 = vpop.permute.xlu0 %457
    %459 = vrot.lane.b32.xlu0 %v418, 126
    %v460 = vpop.permute.xlu0 %459
    %461 = vrot.lane.b32.xlu0 %v419, 126
    %v462 = vpop.permute.xlu0 %461
    %463 = vrot.lane.b32.xlu0 %v420, 126
    %v464 = vpop.permute.xlu0 %463
    %465 = vrot.lane.b32.xlu0 %v421, 126
    %v466 = vpop.permute.xlu0 %465
    %467 = vrot.lane.b32.xlu0 %v422, 126
    %v468 = vpop.permute.xlu0 %467
    %469 = vrot.lane.b32.xlu0 %v423, 126
    %v470 = vpop.permute.xlu0 %469
    %471 = vrot.lane.b32.xlu0 %v424, 126
    %v472 = vpop.permute.xlu0 %471
    %v489 = vadd.f32 %v393, %v442
    %v490 = vadd.f32 %v394, %v444
    %v491 = vadd.f32 %v395, %v446
    %v492 = vadd.f32 %v396, %v448
    %v493 = vadd.f32 %v397, %v450
    %v494 = vadd.f32 %v398, %v452
    %v495 = vadd.f32 %v399, %v454
    %v496 = vadd.f32 %v400, %v456
    %v497 = vadd.f32 %v401, %v458
    %v498 = vadd.f32 %v402, %v460
    %v499 = vadd.f32 %v403, %v462
    %v500 = vadd.f32 %v404, %v464
    %v501 = vadd.f32 %v405, %v466
    %v502 = vadd.f32 %v406, %v468
    %v503 = vadd.f32 %v407, %v470
    %v504 = vadd.f32 %v408, %v472
    %v505 = vmul.f32 %v13, 0.0352262
    %v506 = vmul.f32 %v14, 0.0352262
    %v507 = vmul.f32 %v21, 0.0352262
    %v508 = vmul.f32 %v22, 0.0352262
    %v509 = vmul.f32 %v29, 0.0352262
    %v510 = vmul.f32 %v30, 0.0352262
    %v511 = vmul.f32 %v37, 0.0352262
    %v512 = vmul.f32 %v38, 0.0352262
    %v513 = vmul.f32 %v45, 0.0352262
    %v514 = vmul.f32 %v46, 0.0352262
    %v515 = vmul.f32 %v53, 0.0352262
    %v516 = vmul.f32 %v54, 0.0352262
    %v517 = vmul.f32 %v61, 0.0352262
    %v518 = vmul.f32 %v62, 0.0352262
    %v519 = vmul.f32 %v69, 0.0352262
    %v520 = vmul.f32 %v70, 0.0352262
    %v521 = vmul.f32 %v15, -0.0854412
    %v522 = vmul.f32 %v16, -0.0854412
    %v523 = vmul.f32 %v23, -0.0854412
    %v524 = vmul.f32 %v24, -0.0854412
    %v525 = vmul.f32 %v31, -0.0854412
    %v526 = vmul.f32 %v32, -0.0854412
    %v527 = vmul.f32 %v39, -0.0854412
    %v528 = vmul.f32 %v40, -0.0854412
    %v529 = vmul.f32 %v47, -0.0854412
    %v530 = vmul.f32 %v48, -0.0854412
    %v531 = vmul.f32 %v55, -0.0854412
    %v532 = vmul.f32 %v56, -0.0854412
    %v533 = vmul.f32 %v63, -0.0854412
    %v534 = vmul.f32 %v64, -0.0854412
    %v535 = vmul.f32 %v71, -0.0854412
    %v536 = vmul.f32 %v72, -0.0854412
    %v537 = vadd.f32 %v505, %v521
    %v538 = vadd.f32 %v506, %v522
    %v539 = vadd.f32 %v507, %v523
    %v540 = vadd.f32 %v508, %v524
    %v541 = vadd.f32 %v509, %v525
    %v542 = vadd.f32 %v510, %v526
    %v543 = vadd.f32 %v511, %v527
    %v544 = vadd.f32 %v512, %v528
    %v545 = vadd.f32 %v513, %v529
    %v546 = vadd.f32 %v514, %v530
    %v547 = vadd.f32 %v515, %v531
    %v548 = vadd.f32 %v516, %v532
    %v549 = vadd.f32 %v517, %v533
    %v550 = vadd.f32 %v518, %v534
    %v551 = vadd.f32 %v519, %v535
    %v552 = vadd.f32 %v520, %v536
    %v553 = vmul.f32 %v13, -0.135011
    %v554 = vmul.f32 %v14, -0.135011
    %v555 = vmul.f32 %v21, -0.135011
    %v556 = vmul.f32 %v22, -0.135011
    %v557 = vmul.f32 %v29, -0.135011
    %v558 = vmul.f32 %v30, -0.135011
    %v559 = vmul.f32 %v37, -0.135011
    %v560 = vmul.f32 %v38, -0.135011
    %v561 = vmul.f32 %v45, -0.135011
    %v562 = vmul.f32 %v46, -0.135011
    %v563 = vmul.f32 %v53, -0.135011
    %v564 = vmul.f32 %v54, -0.135011
    %v565 = vmul.f32 %v61, -0.135011
    %v566 = vmul.f32 %v62, -0.135011
    %v567 = vmul.f32 %v69, -0.135011
    %v568 = vmul.f32 %v70, -0.135011
    %585 = vrot.lane.b32.xlu0 %v553, 127
    %v586 = vpop.permute.xlu0 %585
    %587 = vrot.lane.b32.xlu0 %v554, 127
    %v588 = vpop.permute.xlu0 %587
    %589 = vrot.lane.b32.xlu0 %v555, 127
    %v590 = vpop.permute.xlu0 %589
    %591 = vrot.lane.b32.xlu0 %v556, 127
    %v592 = vpop.permute.xlu0 %591
    %593 = vrot.lane.b32.xlu0 %v557, 127
    %v594 = vpop.permute.xlu0 %593
    %595 = vrot.lane.b32.xlu0 %v558, 127
    %v596 = vpop.permute.xlu0 %595
    %597 = vrot.lane.b32.xlu0 %v559, 127
    %v598 = vpop.permute.xlu0 %597
    %599 = vrot.lane.b32.xlu0 %v560, 127
    %v600 = vpop.permute.xlu0 %599
    %601 = vrot.lane.b32.xlu0 %v561, 127
    %v602 = vpop.permute.xlu0 %601
    %603 = vrot.lane.b32.xlu0 %v562, 127
    %v604 = vpop.permute.xlu0 %603
    %605 = vrot.lane.b32.xlu0 %v563, 127
    %v606 = vpop.permute.xlu0 %605
    %607 = vrot.lane.b32.xlu0 %v564, 127
    %v608 = vpop.permute.xlu0 %607
    %609 = vrot.lane.b32.xlu0 %v565, 127
    %v610 = vpop.permute.xlu0 %609
    %611 = vrot.lane.b32.xlu0 %v566, 127
    %v612 = vpop.permute.xlu0 %611
    %613 = vrot.lane.b32.xlu0 %v567, 127
    %v614 = vpop.permute.xlu0 %613
    %615 = vrot.lane.b32.xlu0 %v568, 127
    %v616 = vpop.permute.xlu0 %615
    %v633 = vadd.f32 %v537, %v586
    %v634 = vadd.f32 %v538, %v588
    %v635 = vadd.f32 %v539, %v590
    %v636 = vadd.f32 %v540, %v592
    %v637 = vadd.f32 %v541, %v594
    %v638 = vadd.f32 %v542, %v596
    %v639 = vadd.f32 %v543, %v598
    %v640 = vadd.f32 %v544, %v600
    %v641 = vadd.f32 %v545, %v602
    %v642 = vadd.f32 %v546, %v604
    %v643 = vadd.f32 %v547, %v606
    %v644 = vadd.f32 %v548, %v608
    %v645 = vadd.f32 %v549, %v610
    %v646 = vadd.f32 %v550, %v612
    %v647 = vadd.f32 %v551, %v614
    %v648 = vadd.f32 %v552, %v616
    %v649 = vmul.f32 %v15, 0.4598775
    %v650 = vmul.f32 %v16, 0.4598775
    %v651 = vmul.f32 %v23, 0.4598775
    %v652 = vmul.f32 %v24, 0.4598775
    %v653 = vmul.f32 %v31, 0.4598775
    %v654 = vmul.f32 %v32, 0.4598775
    %v655 = vmul.f32 %v39, 0.4598775
    %v656 = vmul.f32 %v40, 0.4598775
    %v657 = vmul.f32 %v47, 0.4598775
    %v658 = vmul.f32 %v48, 0.4598775
    %v659 = vmul.f32 %v55, 0.4598775
    %v660 = vmul.f32 %v56, 0.4598775
    %v661 = vmul.f32 %v63, 0.4598775
    %v662 = vmul.f32 %v64, 0.4598775
    %v663 = vmul.f32 %v71, 0.4598775
    %v664 = vmul.f32 %v72, 0.4598775
    %681 = vrot.lane.b32.xlu0 %v649, 127
    %v682 = vpop.permute.xlu0 %681
    %683 = vrot.lane.b32.xlu0 %v650, 127
    %v684 = vpop.permute.xlu0 %683
    %685 = vrot.lane.b32.xlu0 %v651, 127
    %v686 = vpop.permute.xlu0 %685
    %687 = vrot.lane.b32.xlu0 %v652, 127
    %v688 = vpop.permute.xlu0 %687
    %689 = vrot.lane.b32.xlu0 %v653, 127
    %v690 = vpop.permute.xlu0 %689
    %691 = vrot.lane.b32.xlu0 %v654, 127
    %v692 = vpop.permute.xlu0 %691
    %693 = vrot.lane.b32.xlu0 %v655, 127
    %v694 = vpop.permute.xlu0 %693
    %695 = vrot.lane.b32.xlu0 %v656, 127
    %v696 = vpop.permute.xlu0 %695
    %697 = vrot.lane.b32.xlu0 %v657, 127
    %v698 = vpop.permute.xlu0 %697
    %699 = vrot.lane.b32.xlu0 %v658, 127
    %v700 = vpop.permute.xlu0 %699
    %701 = vrot.lane.b32.xlu0 %v659, 127
    %v702 = vpop.permute.xlu0 %701
    %703 = vrot.lane.b32.xlu0 %v660, 127
    %v704 = vpop.permute.xlu0 %703
    %705 = vrot.lane.b32.xlu0 %v661, 127
    %v706 = vpop.permute.xlu0 %705
    %707 = vrot.lane.b32.xlu0 %v662, 127
    %v708 = vpop.permute.xlu0 %707
    %709 = vrot.lane.b32.xlu0 %v663, 127
    %v710 = vpop.permute.xlu0 %709
    %711 = vrot.lane.b32.xlu0 %v664, 127
    %v712 = vpop.permute.xlu0 %711
    %v729 = vadd.f32 %v633, %v682
    %v730 = vadd.f32 %v634, %v684
    %v731 = vadd.f32 %v635, %v686
    %v732 = vadd.f32 %v636, %v688
    %v733 = vadd.f32 %v637, %v690
    %v734 = vadd.f32 %v638, %v692
    %v735 = vadd.f32 %v639, %v694
    %v736 = vadd.f32 %v640, %v696
    %v737 = vadd.f32 %v641, %v698
    %v738 = vadd.f32 %v642, %v700
    %v739 = vadd.f32 %v643, %v702
    %v740 = vadd.f32 %v644, %v704
    %v741 = vadd.f32 %v645, %v706
    %v742 = vadd.f32 %v646, %v708
    %v743 = vadd.f32 %v647, %v710
    %v744 = vadd.f32 %v648, %v712
    %v745 = vmul.f32 %v13, 0.8068915
    %v746 = vmul.f32 %v14, 0.8068915
    %v747 = vmul.f32 %v21, 0.8068915
    %v748 = vmul.f32 %v22, 0.8068915
    %v749 = vmul.f32 %v29, 0.8068915
    %v750 = vmul.f32 %v30, 0.8068915
    %v751 = vmul.f32 %v37, 0.8068915
    %v752 = vmul.f32 %v38, 0.8068915
    %v753 = vmul.f32 %v45, 0.8068915
    %v754 = vmul.f32 %v46, 0.8068915
    %v755 = vmul.f32 %v53, 0.8068915
    %v756 = vmul.f32 %v54, 0.8068915
    %v757 = vmul.f32 %v61, 0.8068915
    %v758 = vmul.f32 %v62, 0.8068915
    %v759 = vmul.f32 %v69, 0.8068915
    %v760 = vmul.f32 %v70, 0.8068915
    %777 = vrot.lane.b32.xlu0 %v745, 126
    %v778 = vpop.permute.xlu0 %777
    %779 = vrot.lane.b32.xlu0 %v746, 126
    %v780 = vpop.permute.xlu0 %779
    %781 = vrot.lane.b32.xlu0 %v747, 126
    %v782 = vpop.permute.xlu0 %781
    %783 = vrot.lane.b32.xlu0 %v748, 126
    %v784 = vpop.permute.xlu0 %783
    %785 = vrot.lane.b32.xlu0 %v749, 126
    %v786 = vpop.permute.xlu0 %785
    %787 = vrot.lane.b32.xlu0 %v750, 126
    %v788 = vpop.permute.xlu0 %787
    %789 = vrot.lane.b32.xlu0 %v751, 126
    %v790 = vpop.permute.xlu0 %789
    %791 = vrot.lane.b32.xlu0 %v752, 126
    %v792 = vpop.permute.xlu0 %791
    %793 = vrot.lane.b32.xlu0 %v753, 126
    %v794 = vpop.permute.xlu0 %793
    %795 = vrot.lane.b32.xlu0 %v754, 126
    %v796 = vpop.permute.xlu0 %795
    %797 = vrot.lane.b32.xlu0 %v755, 126
    %v798 = vpop.permute.xlu0 %797
    %799 = vrot.lane.b32.xlu0 %v756, 126
    %v800 = vpop.permute.xlu0 %799
    %801 = vrot.lane.b32.xlu0 %v757, 126
    %v802 = vpop.permute.xlu0 %801
    %803 = vrot.lane.b32.xlu0 %v758, 126
    %v804 = vpop.permute.xlu0 %803
    %805 = vrot.lane.b32.xlu0 %v759, 126
    %v806 = vpop.permute.xlu0 %805
    %807 = vrot.lane.b32.xlu0 %v760, 126
    %v808 = vpop.permute.xlu0 %807
    %v825 = vadd.f32 %v729, %v778
    %v826 = vadd.f32 %v730, %v780
    %v827 = vadd.f32 %v731, %v782
    %v828 = vadd.f32 %v732, %v784
    %v829 = vadd.f32 %v733, %v786
    %v830 = vadd.f32 %v734, %v788
    %v831 = vadd.f32 %v735, %v790
    %v832 = vadd.f32 %v736, %v792
    %v833 = vadd.f32 %v737, %v794
    %v834 = vadd.f32 %v738, %v796
    %v835 = vadd.f32 %v739, %v798
    %v836 = vadd.f32 %v740, %v800
    %v837 = vadd.f32 %v741, %v802
    %v838 = vadd.f32 %v742, %v804
    %v839 = vadd.f32 %v743, %v806
    %v840 = vadd.f32 %v744, %v808
    %v841 = vmul.f32 %v15, 0.3326705
    %v842 = vmul.f32 %v16, 0.3326705
    %v843 = vmul.f32 %v23, 0.3326705
    %v844 = vmul.f32 %v24, 0.3326705
    %v845 = vmul.f32 %v31, 0.3326705
    %v846 = vmul.f32 %v32, 0.3326705
    %v847 = vmul.f32 %v39, 0.3326705
    %v848 = vmul.f32 %v40, 0.3326705
    %v849 = vmul.f32 %v47, 0.3326705
    %v850 = vmul.f32 %v48, 0.3326705
    %v851 = vmul.f32 %v55, 0.3326705
    %v852 = vmul.f32 %v56, 0.3326705
    %v853 = vmul.f32 %v63, 0.3326705
    %v854 = vmul.f32 %v64, 0.3326705
    %v855 = vmul.f32 %v71, 0.3326705
    %v856 = vmul.f32 %v72, 0.3326705
    %873 = vrot.lane.b32.xlu0 %v841, 126
    %v874 = vpop.permute.xlu0 %873
    %875 = vrot.lane.b32.xlu0 %v842, 126
    %v876 = vpop.permute.xlu0 %875
    %877 = vrot.lane.b32.xlu0 %v843, 126
    %v878 = vpop.permute.xlu0 %877
    %879 = vrot.lane.b32.xlu0 %v844, 126
    %v880 = vpop.permute.xlu0 %879
    %881 = vrot.lane.b32.xlu0 %v845, 126
    %v882 = vpop.permute.xlu0 %881
    %883 = vrot.lane.b32.xlu0 %v846, 126
    %v884 = vpop.permute.xlu0 %883
    %885 = vrot.lane.b32.xlu0 %v847, 126
    %v886 = vpop.permute.xlu0 %885
    %887 = vrot.lane.b32.xlu0 %v848, 126
    %v888 = vpop.permute.xlu0 %887
    %889 = vrot.lane.b32.xlu0 %v849, 126
    %v890 = vpop.permute.xlu0 %889
    %891 = vrot.lane.b32.xlu0 %v850, 126
    %v892 = vpop.permute.xlu0 %891
    %893 = vrot.lane.b32.xlu0 %v851, 126
    %v894 = vpop.permute.xlu0 %893
    %895 = vrot.lane.b32.xlu0 %v852, 126
    %v896 = vpop.permute.xlu0 %895
    %897 = vrot.lane.b32.xlu0 %v853, 126
    %v898 = vpop.permute.xlu0 %897
    %899 = vrot.lane.b32.xlu0 %v854, 126
    %v900 = vpop.permute.xlu0 %899
    %901 = vrot.lane.b32.xlu0 %v855, 126
    %v902 = vpop.permute.xlu0 %901
    %903 = vrot.lane.b32.xlu0 %v856, 126
    %v904 = vpop.permute.xlu0 %903
    %v921 = vadd.f32 %v825, %v874
    %v922 = vadd.f32 %v826, %v876
    %v923 = vadd.f32 %v827, %v878
    %v924 = vadd.f32 %v828, %v880
    %v925 = vadd.f32 %v829, %v882
    %v926 = vadd.f32 %v830, %v884
    %v927 = vadd.f32 %v831, %v886
    %v928 = vadd.f32 %v832, %v888
    %v929 = vadd.f32 %v833, %v890
    %v930 = vadd.f32 %v834, %v892
    %v931 = vadd.f32 %v835, %v894
    %v932 = vadd.f32 %v836, %v896
    %v933 = vadd.f32 %v837, %v898
    %v934 = vadd.f32 %v838, %v900
    %v935 = vadd.f32 %v839, %v902
    %v936 = vadd.f32 %v840, %v904
    %v937 = vmul.f32 %v9, -0.3326705
    %v938 = vmul.f32 %v10, -0.3326705
    %v939 = vmul.f32 %v17, -0.3326705
    %v940 = vmul.f32 %v18, -0.3326705
    %v941 = vmul.f32 %v25, -0.3326705
    %v942 = vmul.f32 %v26, -0.3326705
    %v943 = vmul.f32 %v33, -0.3326705
    %v944 = vmul.f32 %v34, -0.3326705
    %v945 = vmul.f32 %v41, -0.3326705
    %v946 = vmul.f32 %v42, -0.3326705
    %v947 = vmul.f32 %v49, -0.3326705
    %v948 = vmul.f32 %v50, -0.3326705
    %v949 = vmul.f32 %v57, -0.3326705
    %v950 = vmul.f32 %v58, -0.3326705
    %v951 = vmul.f32 %v65, -0.3326705
    %v952 = vmul.f32 %v66, -0.3326705
    %v953 = vmul.f32 %v11, 0.8068915
    %v954 = vmul.f32 %v12, 0.8068915
    %v955 = vmul.f32 %v19, 0.8068915
    %v956 = vmul.f32 %v20, 0.8068915
    %v957 = vmul.f32 %v27, 0.8068915
    %v958 = vmul.f32 %v28, 0.8068915
    %v959 = vmul.f32 %v35, 0.8068915
    %v960 = vmul.f32 %v36, 0.8068915
    %v961 = vmul.f32 %v43, 0.8068915
    %v962 = vmul.f32 %v44, 0.8068915
    %v963 = vmul.f32 %v51, 0.8068915
    %v964 = vmul.f32 %v52, 0.8068915
    %v965 = vmul.f32 %v59, 0.8068915
    %v966 = vmul.f32 %v60, 0.8068915
    %v967 = vmul.f32 %v67, 0.8068915
    %v968 = vmul.f32 %v68, 0.8068915
    %v969 = vadd.f32 %v937, %v953
    %v970 = vadd.f32 %v938, %v954
    %v971 = vadd.f32 %v939, %v955
    %v972 = vadd.f32 %v940, %v956
    %v973 = vadd.f32 %v941, %v957
    %v974 = vadd.f32 %v942, %v958
    %v975 = vadd.f32 %v943, %v959
    %v976 = vadd.f32 %v944, %v960
    %v977 = vadd.f32 %v945, %v961
    %v978 = vadd.f32 %v946, %v962
    %v979 = vadd.f32 %v947, %v963
    %v980 = vadd.f32 %v948, %v964
    %v981 = vadd.f32 %v949, %v965
    %v982 = vadd.f32 %v950, %v966
    %v983 = vadd.f32 %v951, %v967
    %v984 = vadd.f32 %v952, %v968
    %v985 = vmul.f32 %v9, -0.4598775
    %v986 = vmul.f32 %v10, -0.4598775
    %v987 = vmul.f32 %v17, -0.4598775
    %v988 = vmul.f32 %v18, -0.4598775
    %v989 = vmul.f32 %v25, -0.4598775
    %v990 = vmul.f32 %v26, -0.4598775
    %v991 = vmul.f32 %v33, -0.4598775
    %v992 = vmul.f32 %v34, -0.4598775
    %v993 = vmul.f32 %v41, -0.4598775
    %v994 = vmul.f32 %v42, -0.4598775
    %v995 = vmul.f32 %v49, -0.4598775
    %v996 = vmul.f32 %v50, -0.4598775
    %v997 = vmul.f32 %v57, -0.4598775
    %v998 = vmul.f32 %v58, -0.4598775
    %v999 = vmul.f32 %v65, -0.4598775
    %v1000 = vmul.f32 %v66, -0.4598775
    %1017 = vrot.lane.b32.xlu0 %v985, 127
    %v1018 = vpop.permute.xlu0 %1017
    %1019 = vrot.lane.b32.xlu0 %v986, 127
    %v1020 = vpop.permute.xlu0 %1019
    %1021 = vrot.lane.b32.xlu0 %v987, 127
    %v1022 = vpop.permute.xlu0 %1021
    %1023 = vrot.lane.b32.xlu0 %v988, 127
    %v1024 = vpop.permute.xlu0 %1023
    %1025 = vrot.lane.b32.xlu0 %v989, 127
    %v1026 = vpop.permute.xlu0 %1025
    %1027 = vrot.lane.b32.xlu0 %v990, 127
    %v1028 = vpop.permute.xlu0 %1027
    %1029 = vrot.lane.b32.xlu0 %v991, 127
    %v1030 = vpop.permute.xlu0 %1029
    %1031 = vrot.lane.b32.xlu0 %v992, 127
    %v1032 = vpop.permute.xlu0 %1031
    %1033 = vrot.lane.b32.xlu0 %v993, 127
    %v1034 = vpop.permute.xlu0 %1033
    %1035 = vrot.lane.b32.xlu0 %v994, 127
    %v1036 = vpop.permute.xlu0 %1035
    %1037 = vrot.lane.b32.xlu0 %v995, 127
    %v1038 = vpop.permute.xlu0 %1037
    %1039 = vrot.lane.b32.xlu0 %v996, 127
    %v1040 = vpop.permute.xlu0 %1039
    %1041 = vrot.lane.b32.xlu0 %v997, 127
    %v1042 = vpop.permute.xlu0 %1041
    %1043 = vrot.lane.b32.xlu0 %v998, 127
    %v1044 = vpop.permute.xlu0 %1043
    %1045 = vrot.lane.b32.xlu0 %v999, 127
    %v1046 = vpop.permute.xlu0 %1045
    %1047 = vrot.lane.b32.xlu0 %v1000, 127
    %v1048 = vpop.permute.xlu0 %1047
    %v1065 = vadd.f32 %v969, %v1018
    %v1066 = vadd.f32 %v970, %v1020
    %v1067 = vadd.f32 %v971, %v1022
    %v1068 = vadd.f32 %v972, %v1024
    %v1069 = vadd.f32 %v973, %v1026
    %v1070 = vadd.f32 %v974, %v1028
    %v1071 = vadd.f32 %v975, %v1030
    %v1072 = vadd.f32 %v976, %v1032
    %v1073 = vadd.f32 %v977, %v1034
    %v1074 = vadd.f32 %v978, %v1036
    %v1075 = vadd.f32 %v979, %v1038
    %v1076 = vadd.f32 %v980, %v1040
    %v1077 = vadd.f32 %v981, %v1042
    %v1078 = vadd.f32 %v982, %v1044
    %v1079 = vadd.f32 %v983, %v1046
    %v1080 = vadd.f32 %v984, %v1048
    %v1081 = vmul.f32 %v11, -0.135011
    %v1082 = vmul.f32 %v12, -0.135011
    %v1083 = vmul.f32 %v19, -0.135011
    %v1084 = vmul.f32 %v20, -0.135011
    %v1085 = vmul.f32 %v27, -0.135011
    %v1086 = vmul.f32 %v28, -0.135011
    %v1087 = vmul.f32 %v35, -0.135011
    %v1088 = vmul.f32 %v36, -0.135011
    %v1089 = vmul.f32 %v43, -0.135011
    %v1090 = vmul.f32 %v44, -0.135011
    %v1091 = vmul.f32 %v51, -0.135011
    %v1092 = vmul.f32 %v52, -0.135011
    %v1093 = vmul.f32 %v59, -0.135011
    %v1094 = vmul.f32 %v60, -0.135011
    %v1095 = vmul.f32 %v67, -0.135011
    %v1096 = vmul.f32 %v68, -0.135011
    %1113 = vrot.lane.b32.xlu0 %v1081, 127
    %v1114 = vpop.permute.xlu0 %1113
    %1115 = vrot.lane.b32.xlu0 %v1082, 127
    %v1116 = vpop.permute.xlu0 %1115
    %1117 = vrot.lane.b32.xlu0 %v1083, 127
    %v1118 = vpop.permute.xlu0 %1117
    %1119 = vrot.lane.b32.xlu0 %v1084, 127
    %v1120 = vpop.permute.xlu0 %1119
    %1121 = vrot.lane.b32.xlu0 %v1085, 127
    %v1122 = vpop.permute.xlu0 %1121
    %1123 = vrot.lane.b32.xlu0 %v1086, 127
    %v1124 = vpop.permute.xlu0 %1123
    %1125 = vrot.lane.b32.xlu0 %v1087, 127
    %v1126 = vpop.permute.xlu0 %1125
    %1127 = vrot.lane.b32.xlu0 %v1088, 127
    %v1128 = vpop.permute.xlu0 %1127
    %1129 = vrot.lane.b32.xlu0 %v1089, 127
    %v1130 = vpop.permute.xlu0 %1129
    %1131 = vrot.lane.b32.xlu0 %v1090, 127
    %v1132 = vpop.permute.xlu0 %1131
    %1133 = vrot.lane.b32.xlu0 %v1091, 127
    %v1134 = vpop.permute.xlu0 %1133
    %1135 = vrot.lane.b32.xlu0 %v1092, 127
    %v1136 = vpop.permute.xlu0 %1135
    %1137 = vrot.lane.b32.xlu0 %v1093, 127
    %v1138 = vpop.permute.xlu0 %1137
    %1139 = vrot.lane.b32.xlu0 %v1094, 127
    %v1140 = vpop.permute.xlu0 %1139
    %1141 = vrot.lane.b32.xlu0 %v1095, 127
    %v1142 = vpop.permute.xlu0 %1141
    %1143 = vrot.lane.b32.xlu0 %v1096, 127
    %v1144 = vpop.permute.xlu0 %1143
    %v1161 = vadd.f32 %v1065, %v1114
    %v1162 = vadd.f32 %v1066, %v1116
    %v1163 = vadd.f32 %v1067, %v1118
    %v1164 = vadd.f32 %v1068, %v1120
    %v1165 = vadd.f32 %v1069, %v1122
    %v1166 = vadd.f32 %v1070, %v1124
    %v1167 = vadd.f32 %v1071, %v1126
    %v1168 = vadd.f32 %v1072, %v1128
    %v1169 = vadd.f32 %v1073, %v1130
    %v1170 = vadd.f32 %v1074, %v1132
    %v1171 = vadd.f32 %v1075, %v1134
    %v1172 = vadd.f32 %v1076, %v1136
    %v1173 = vadd.f32 %v1077, %v1138
    %v1174 = vadd.f32 %v1078, %v1140
    %v1175 = vadd.f32 %v1079, %v1142
    %v1176 = vadd.f32 %v1080, %v1144
    %v1177 = vmul.f32 %v9, 0.0854412
    %v1178 = vmul.f32 %v10, 0.0854412
    %v1179 = vmul.f32 %v17, 0.0854412
    %v1180 = vmul.f32 %v18, 0.0854412
    %v1181 = vmul.f32 %v25, 0.0854412
    %v1182 = vmul.f32 %v26, 0.0854412
    %v1183 = vmul.f32 %v33, 0.0854412
    %v1184 = vmul.f32 %v34, 0.0854412
    %v1185 = vmul.f32 %v41, 0.0854412
    %v1186 = vmul.f32 %v42, 0.0854412
    %v1187 = vmul.f32 %v49, 0.0854412
    %v1188 = vmul.f32 %v50, 0.0854412
    %v1189 = vmul.f32 %v57, 0.0854412
    %v1190 = vmul.f32 %v58, 0.0854412
    %v1191 = vmul.f32 %v65, 0.0854412
    %v1192 = vmul.f32 %v66, 0.0854412
    %1209 = vrot.lane.b32.xlu0 %v1177, 126
    %v1210 = vpop.permute.xlu0 %1209
    %1211 = vrot.lane.b32.xlu0 %v1178, 126
    %v1212 = vpop.permute.xlu0 %1211
    %1213 = vrot.lane.b32.xlu0 %v1179, 126
    %v1214 = vpop.permute.xlu0 %1213
    %1215 = vrot.lane.b32.xlu0 %v1180, 126
    %v1216 = vpop.permute.xlu0 %1215
    %1217 = vrot.lane.b32.xlu0 %v1181, 126
    %v1218 = vpop.permute.xlu0 %1217
    %1219 = vrot.lane.b32.xlu0 %v1182, 126
    %v1220 = vpop.permute.xlu0 %1219
    %1221 = vrot.lane.b32.xlu0 %v1183, 126
    %v1222 = vpop.permute.xlu0 %1221
    %1223 = vrot.lane.b32.xlu0 %v1184, 126
    %v1224 = vpop.permute.xlu0 %1223
    %1225 = vrot.lane.b32.xlu0 %v1185, 126
    %v1226 = vpop.permute.xlu0 %1225
    %1227 = vrot.lane.b32.xlu0 %v1186, 126
    %v1228 = vpop.permute.xlu0 %1227
    %1229 = vrot.lane.b32.xlu0 %v1187, 126
    %v1230 = vpop.permute.xlu0 %1229
    %1231 = vrot.lane.b32.xlu0 %v1188, 126
    %v1232 = vpop.permute.xlu0 %1231
    %1233 = vrot.lane.b32.xlu0 %v1189, 126
    %v1234 = vpop.permute.xlu0 %1233
    %1235 = vrot.lane.b32.xlu0 %v1190, 126
    %v1236 = vpop.permute.xlu0 %1235
    %1237 = vrot.lane.b32.xlu0 %v1191, 126
    %v1238 = vpop.permute.xlu0 %1237
    %1239 = vrot.lane.b32.xlu0 %v1192, 126
    %v1240 = vpop.permute.xlu0 %1239
    %v1257 = vadd.f32 %v1161, %v1210
    %v1258 = vadd.f32 %v1162, %v1212
    %v1259 = vadd.f32 %v1163, %v1214
    %v1260 = vadd.f32 %v1164, %v1216
    %v1261 = vadd.f32 %v1165, %v1218
    %v1262 = vadd.f32 %v1166, %v1220
    %v1263 = vadd.f32 %v1167, %v1222
    %v1264 = vadd.f32 %v1168, %v1224
    %v1265 = vadd.f32 %v1169, %v1226
    %v1266 = vadd.f32 %v1170, %v1228
    %v1267 = vadd.f32 %v1171, %v1230
    %v1268 = vadd.f32 %v1172, %v1232
    %v1269 = vadd.f32 %v1173, %v1234
    %v1270 = vadd.f32 %v1174, %v1236
    %v1271 = vadd.f32 %v1175, %v1238
    %v1272 = vadd.f32 %v1176, %v1240
    %v1273 = vmul.f32 %v11, 0.0352262
    %v1274 = vmul.f32 %v12, 0.0352262
    %v1275 = vmul.f32 %v19, 0.0352262
    %v1276 = vmul.f32 %v20, 0.0352262
    %v1277 = vmul.f32 %v27, 0.0352262
    %v1278 = vmul.f32 %v28, 0.0352262
    %v1279 = vmul.f32 %v35, 0.0352262
    %v1280 = vmul.f32 %v36, 0.0352262
    %v1281 = vmul.f32 %v43, 0.0352262
    %v1282 = vmul.f32 %v44, 0.0352262
    %v1283 = vmul.f32 %v51, 0.0352262
    %v1284 = vmul.f32 %v52, 0.0352262
    %v1285 = vmul.f32 %v59, 0.0352262
    %v1286 = vmul.f32 %v60, 0.0352262
    %v1287 = vmul.f32 %v67, 0.0352262
    %v1288 = vmul.f32 %v68, 0.0352262
    %1305 = vrot.lane.b32.xlu0 %v1273, 126
    %v1306 = vpop.permute.xlu0 %1305
    %1307 = vrot.lane.b32.xlu0 %v1274, 126
    %v1308 = vpop.permute.xlu0 %1307
    %1309 = vrot.lane.b32.xlu0 %v1275, 126
    %v1310 = vpop.permute.xlu0 %1309
    %1311 = vrot.lane.b32.xlu0 %v1276, 126
    %v1312 = vpop.permute.xlu0 %1311
    %1313 = vrot.lane.b32.xlu0 %v1277, 126
    %v1314 = vpop.permute.xlu0 %1313
    %1315 = vrot.lane.b32.xlu0 %v1278, 126
    %v1316 = vpop.permute.xlu0 %1315
    %1317 = vrot.lane.b32.xlu0 %v1279, 126
    %v1318 = vpop.permute.xlu0 %1317
    %1319 = vrot.lane.b32.xlu0 %v1280, 126
    %v1320 = vpop.permute.xlu0 %1319
    %1321 = vrot.lane.b32.xlu0 %v1281, 126
    %v1322 = vpop.permute.xlu0 %1321
    %1323 = vrot.lane.b32.xlu0 %v1282, 126
    %v1324 = vpop.permute.xlu0 %1323
    %1325 = vrot.lane.b32.xlu0 %v1283, 126
    %v1326 = vpop.permute.xlu0 %1325
    %1327 = vrot.lane.b32.xlu0 %v1284, 126
    %v1328 = vpop.permute.xlu0 %1327
    %1329 = vrot.lane.b32.xlu0 %v1285, 126
    %v1330 = vpop.permute.xlu0 %1329
    %1331 = vrot.lane.b32.xlu0 %v1286, 126
    %v1332 = vpop.permute.xlu0 %1331
    %1333 = vrot.lane.b32.xlu0 %v1287, 126
    %v1334 = vpop.permute.xlu0 %1333
    %1335 = vrot.lane.b32.xlu0 %v1288, 126
    %v1336 = vpop.permute.xlu0 %1335
    %v1353 = vadd.f32 %v1257, %v1306
    %v1354 = vadd.f32 %v1258, %v1308
    %v1355 = vadd.f32 %v1259, %v1310
    %v1356 = vadd.f32 %v1260, %v1312
    %v1357 = vadd.f32 %v1261, %v1314
    %v1358 = vadd.f32 %v1262, %v1316
    %v1359 = vadd.f32 %v1263, %v1318
    %v1360 = vadd.f32 %v1264, %v1320
    %v1361 = vadd.f32 %v1265, %v1322
    %v1362 = vadd.f32 %v1266, %v1324
    %v1363 = vadd.f32 %v1267, %v1326
    %v1364 = vadd.f32 %v1268, %v1328
    %v1365 = vadd.f32 %v1269, %v1330
    %v1366 = vadd.f32 %v1270, %v1332
    %v1367 = vadd.f32 %v1271, %v1334
    %v1368 = vadd.f32 %v1272, %v1336
    %v1369 = vmul.f32 %v13, -0.3326705
    %v1370 = vmul.f32 %v14, -0.3326705
    %v1371 = vmul.f32 %v21, -0.3326705
    %v1372 = vmul.f32 %v22, -0.3326705
    %v1373 = vmul.f32 %v29, -0.3326705
    %v1374 = vmul.f32 %v30, -0.3326705
    %v1375 = vmul.f32 %v37, -0.3326705
    %v1376 = vmul.f32 %v38, -0.3326705
    %v1377 = vmul.f32 %v45, -0.3326705
    %v1378 = vmul.f32 %v46, -0.3326705
    %v1379 = vmul.f32 %v53, -0.3326705
    %v1380 = vmul.f32 %v54, -0.3326705
    %v1381 = vmul.f32 %v61, -0.3326705
    %v1382 = vmul.f32 %v62, -0.3326705
    %v1383 = vmul.f32 %v69, -0.3326705
    %v1384 = vmul.f32 %v70, -0.3326705
    %v1385 = vmul.f32 %v15, 0.8068915
    %v1386 = vmul.f32 %v16, 0.8068915
    %v1387 = vmul.f32 %v23, 0.8068915
    %v1388 = vmul.f32 %v24, 0.8068915
    %v1389 = vmul.f32 %v31, 0.8068915
    %v1390 = vmul.f32 %v32, 0.8068915
    %v1391 = vmul.f32 %v39, 0.8068915
    %v1392 = vmul.f32 %v40, 0.8068915
    %v1393 = vmul.f32 %v47, 0.8068915
    %v1394 = vmul.f32 %v48, 0.8068915
    %v1395 = vmul.f32 %v55, 0.8068915
    %v1396 = vmul.f32 %v56, 0.8068915
    %v1397 = vmul.f32 %v63, 0.8068915
    %v1398 = vmul.f32 %v64, 0.8068915
    %v1399 = vmul.f32 %v71, 0.8068915
    %v1400 = vmul.f32 %v72, 0.8068915
    %v1401 = vadd.f32 %v1369, %v1385
    %v1402 = vadd.f32 %v1370, %v1386
    %v1403 = vadd.f32 %v1371, %v1387
    %v1404 = vadd.f32 %v1372, %v1388
    %v1405 = vadd.f32 %v1373, %v1389
    %v1406 = vadd.f32 %v1374, %v1390
    %v1407 = vadd.f32 %v1375, %v1391
    %v1408 = vadd.f32 %v1376, %v1392
    %v1409 = vadd.f32 %v1377, %v1393
    %v1410 = vadd.f32 %v1378, %v1394
    %v1411 = vadd.f32 %v1379, %v1395
    %v1412 = vadd.f32 %v1380, %v1396
    %v1413 = vadd.f32 %v1381, %v1397
    %v1414 = vadd.f32 %v1382, %v1398
    %v1415 = vadd.f32 %v1383, %v1399
    %v1416 = vadd.f32 %v1384, %v1400
    %v1417 = vmul.f32 %v13, -0.4598775
    %v1418 = vmul.f32 %v14, -0.4598775
    %v1419 = vmul.f32 %v21, -0.4598775
    %v1420 = vmul.f32 %v22, -0.4598775
    %v1421 = vmul.f32 %v29, -0.4598775
    %v1422 = vmul.f32 %v30, -0.4598775
    %v1423 = vmul.f32 %v37, -0.4598775
    %v1424 = vmul.f32 %v38, -0.4598775
    %v1425 = vmul.f32 %v45, -0.4598775
    %v1426 = vmul.f32 %v46, -0.4598775
    %v1427 = vmul.f32 %v53, -0.4598775
    %v1428 = vmul.f32 %v54, -0.4598775
    %v1429 = vmul.f32 %v61, -0.4598775
    %v1430 = vmul.f32 %v62, -0.4598775
    %v1431 = vmul.f32 %v69, -0.4598775
    %v1432 = vmul.f32 %v70, -0.4598775
    %1449 = vrot.lane.b32.xlu0 %v1417, 127
    %v1450 = vpop.permute.xlu0 %1449
    %1451 = vrot.lane.b32.xlu0 %v1418, 127
    %v1452 = vpop.permute.xlu0 %1451
    %1453 = vrot.lane.b32.xlu0 %v1419, 127
    %v1454 = vpop.permute.xlu0 %1453
    %1455 = vrot.lane.b32.xlu0 %v1420, 127
    %v1456 = vpop.permute.xlu0 %1455
    %1457 = vrot.lane.b32.xlu0 %v1421, 127
    %v1458 = vpop.permute.xlu0 %1457
    %1459 = vrot.lane.b32.xlu0 %v1422, 127
    %v1460 = vpop.permute.xlu0 %1459
    %1461 = vrot.lane.b32.xlu0 %v1423, 127
    %v1462 = vpop.permute.xlu0 %1461
    %1463 = vrot.lane.b32.xlu0 %v1424, 127
    %v1464 = vpop.permute.xlu0 %1463
    %1465 = vrot.lane.b32.xlu0 %v1425, 127
    %v1466 = vpop.permute.xlu0 %1465
    %1467 = vrot.lane.b32.xlu0 %v1426, 127
    %v1468 = vpop.permute.xlu0 %1467
    %1469 = vrot.lane.b32.xlu0 %v1427, 127
    %v1470 = vpop.permute.xlu0 %1469
    %1471 = vrot.lane.b32.xlu0 %v1428, 127
    %v1472 = vpop.permute.xlu0 %1471
    %1473 = vrot.lane.b32.xlu0 %v1429, 127
    %v1474 = vpop.permute.xlu0 %1473
    %1475 = vrot.lane.b32.xlu0 %v1430, 127
    %v1476 = vpop.permute.xlu0 %1475
    %1477 = vrot.lane.b32.xlu0 %v1431, 127
    %v1478 = vpop.permute.xlu0 %1477
    %1479 = vrot.lane.b32.xlu0 %v1432, 127
    %v1480 = vpop.permute.xlu0 %1479
    %v1497 = vadd.f32 %v1401, %v1450
    %v1498 = vadd.f32 %v1402, %v1452
    %v1499 = vadd.f32 %v1403, %v1454
    %v1500 = vadd.f32 %v1404, %v1456
    %v1501 = vadd.f32 %v1405, %v1458
    %v1502 = vadd.f32 %v1406, %v1460
    %v1503 = vadd.f32 %v1407, %v1462
    %v1504 = vadd.f32 %v1408, %v1464
    %v1505 = vadd.f32 %v1409, %v1466
    %v1506 = vadd.f32 %v1410, %v1468
    %v1507 = vadd.f32 %v1411, %v1470
    %v1508 = vadd.f32 %v1412, %v1472
    %v1509 = vadd.f32 %v1413, %v1474
    %v1510 = vadd.f32 %v1414, %v1476
    %v1511 = vadd.f32 %v1415, %v1478
    %v1512 = vadd.f32 %v1416, %v1480
    %v1513 = vmul.f32 %v15, -0.135011
    %v1514 = vmul.f32 %v16, -0.135011
    %v1515 = vmul.f32 %v23, -0.135011
    %v1516 = vmul.f32 %v24, -0.135011
    %v1517 = vmul.f32 %v31, -0.135011
    %v1518 = vmul.f32 %v32, -0.135011
    %v1519 = vmul.f32 %v39, -0.135011
    %v1520 = vmul.f32 %v40, -0.135011
    %v1521 = vmul.f32 %v47, -0.135011
    %v1522 = vmul.f32 %v48, -0.135011
    %v1523 = vmul.f32 %v55, -0.135011
    %v1524 = vmul.f32 %v56, -0.135011
    %v1525 = vmul.f32 %v63, -0.135011
    %v1526 = vmul.f32 %v64, -0.135011
    %v1527 = vmul.f32 %v71, -0.135011
    %v1528 = vmul.f32 %v72, -0.135011
    %1545 = vrot.lane.b32.xlu0 %v1513, 127
    %v1546 = vpop.permute.xlu0 %1545
    %1547 = vrot.lane.b32.xlu0 %v1514, 127
    %v1548 = vpop.permute.xlu0 %1547
    %1549 = vrot.lane.b32.xlu0 %v1515, 127
    %v1550 = vpop.permute.xlu0 %1549
    %1551 = vrot.lane.b32.xlu0 %v1516, 127
    %v1552 = vpop.permute.xlu0 %1551
    %1553 = vrot.lane.b32.xlu0 %v1517, 127
    %v1554 = vpop.permute.xlu0 %1553
    %1555 = vrot.lane.b32.xlu0 %v1518, 127
    %v1556 = vpop.permute.xlu0 %1555
    %1557 = vrot.lane.b32.xlu0 %v1519, 127
    %v1558 = vpop.permute.xlu0 %1557
    %1559 = vrot.lane.b32.xlu0 %v1520, 127
    %v1560 = vpop.permute.xlu0 %1559
    %1561 = vrot.lane.b32.xlu0 %v1521, 127
    %v1562 = vpop.permute.xlu0 %1561
    %1563 = vrot.lane.b32.xlu0 %v1522, 127
    %v1564 = vpop.permute.xlu0 %1563
    %1565 = vrot.lane.b32.xlu0 %v1523, 127
    %v1566 = vpop.permute.xlu0 %1565
    %1567 = vrot.lane.b32.xlu0 %v1524, 127
    %v1568 = vpop.permute.xlu0 %1567
    %1569 = vrot.lane.b32.xlu0 %v1525, 127
    %v1570 = vpop.permute.xlu0 %1569
    %1571 = vrot.lane.b32.xlu0 %v1526, 127
    %v1572 = vpop.permute.xlu0 %1571
    %1573 = vrot.lane.b32.xlu0 %v1527, 127
    %v1574 = vpop.permute.xlu0 %1573
    %1575 = vrot.lane.b32.xlu0 %v1528, 127
    %v1576 = vpop.permute.xlu0 %1575
    %v1593 = vadd.f32 %v1497, %v1546
    %v1594 = vadd.f32 %v1498, %v1548
    %v1595 = vadd.f32 %v1499, %v1550
    %v1596 = vadd.f32 %v1500, %v1552
    %v1597 = vadd.f32 %v1501, %v1554
    %v1598 = vadd.f32 %v1502, %v1556
    %v1599 = vadd.f32 %v1503, %v1558
    %v1600 = vadd.f32 %v1504, %v1560
    %v1601 = vadd.f32 %v1505, %v1562
    %v1602 = vadd.f32 %v1506, %v1564
    %v1603 = vadd.f32 %v1507, %v1566
    %v1604 = vadd.f32 %v1508, %v1568
    %v1605 = vadd.f32 %v1509, %v1570
    %v1606 = vadd.f32 %v1510, %v1572
    %v1607 = vadd.f32 %v1511, %v1574
    %v1608 = vadd.f32 %v1512, %v1576
    %v1609 = vmul.f32 %v13, 0.0854412
    %v1610 = vmul.f32 %v14, 0.0854412
    %v1611 = vmul.f32 %v21, 0.0854412
    %v1612 = vmul.f32 %v22, 0.0854412
    %v1613 = vmul.f32 %v29, 0.0854412
    %v1614 = vmul.f32 %v30, 0.0854412
    %v1615 = vmul.f32 %v37, 0.0854412
    %v1616 = vmul.f32 %v38, 0.0854412
    %v1617 = vmul.f32 %v45, 0.0854412
    %v1618 = vmul.f32 %v46, 0.0854412
    %v1619 = vmul.f32 %v53, 0.0854412
    %v1620 = vmul.f32 %v54, 0.0854412
    %v1621 = vmul.f32 %v61, 0.0854412
    %v1622 = vmul.f32 %v62, 0.0854412
    %v1623 = vmul.f32 %v69, 0.0854412
    %v1624 = vmul.f32 %v70, 0.0854412
    %1641 = vrot.lane.b32.xlu0 %v1609, 126
    %v1642 = vpop.permute.xlu0 %1641
    %1643 = vrot.lane.b32.xlu0 %v1610, 126
    %v1644 = vpop.permute.xlu0 %1643
    %1645 = vrot.lane.b32.xlu0 %v1611, 126
    %v1646 = vpop.permute.xlu0 %1645
    %1647 = vrot.lane.b32.xlu0 %v1612, 126
    %v1648 = vpop.permute.xlu0 %1647
    %1649 = vrot.lane.b32.xlu0 %v1613, 126
    %v1650 = vpop.permute.xlu0 %1649
    %1651 = vrot.lane.b32.xlu0 %v1614, 126
    %v1652 = vpop.permute.xlu0 %1651
    %1653 = vrot.lane.b32.xlu0 %v1615, 126
    %v1654 = vpop.permute.xlu0 %1653
    %1655 = vrot.lane.b32.xlu0 %v1616, 126
    %v1656 = vpop.permute.xlu0 %1655
    %1657 = vrot.lane.b32.xlu0 %v1617, 126
    %v1658 = vpop.permute.xlu0 %1657
    %1659 = vrot.lane.b32.xlu0 %v1618, 126
    %v1660 = vpop.permute.xlu0 %1659
    %1661 = vrot.lane.b32.xlu0 %v1619, 126
    %v1662 = vpop.permute.xlu0 %1661
    %1663 = vrot.lane.b32.xlu0 %v1620, 126
    %v1664 = vpop.permute.xlu0 %1663
    %1665 = vrot.lane.b32.xlu0 %v1621, 126
    %v1666 = vpop.permute.xlu0 %1665
    %1667 = vrot.lane.b32.xlu0 %v1622, 126
    %v1668 = vpop.permute.xlu0 %1667
    %1669 = vrot.lane.b32.xlu0 %v1623, 126
    %v1670 = vpop.permute.xlu0 %1669
    %1671 = vrot.lane.b32.xlu0 %v1624, 126
    %v1672 = vpop.permute.xlu0 %1671
    %v1689 = vadd.f32 %v1593, %v1642
    %v1690 = vadd.f32 %v1594, %v1644
    %v1691 = vadd.f32 %v1595, %v1646
    %v1692 = vadd.f32 %v1596, %v1648
    %v1693 = vadd.f32 %v1597, %v1650
    %v1694 = vadd.f32 %v1598, %v1652
    %v1695 = vadd.f32 %v1599, %v1654
    %v1696 = vadd.f32 %v1600, %v1656
    %v1697 = vadd.f32 %v1601, %v1658
    %v1698 = vadd.f32 %v1602, %v1660
    %v1699 = vadd.f32 %v1603, %v1662
    %v1700 = vadd.f32 %v1604, %v1664
    %v1701 = vadd.f32 %v1605, %v1666
    %v1702 = vadd.f32 %v1606, %v1668
    %v1703 = vadd.f32 %v1607, %v1670
    %v1704 = vadd.f32 %v1608, %v1672
    %v1705 = vmul.f32 %v15, 0.0352262
    %v1706 = vmul.f32 %v16, 0.0352262
    %v1707 = vmul.f32 %v23, 0.0352262
    %v1708 = vmul.f32 %v24, 0.0352262
    %v1709 = vmul.f32 %v31, 0.0352262
    %v1710 = vmul.f32 %v32, 0.0352262
    %v1711 = vmul.f32 %v39, 0.0352262
    %v1712 = vmul.f32 %v40, 0.0352262
    %v1713 = vmul.f32 %v47, 0.0352262
    %v1714 = vmul.f32 %v48, 0.0352262
    %v1715 = vmul.f32 %v55, 0.0352262
    %v1716 = vmul.f32 %v56, 0.0352262
    %v1717 = vmul.f32 %v63, 0.0352262
    %v1718 = vmul.f32 %v64, 0.0352262
    %v1719 = vmul.f32 %v71, 0.0352262
    %v1720 = vmul.f32 %v72, 0.0352262
    %1737 = vrot.lane.b32.xlu0 %v1705, 126
    %v1738 = vpop.permute.xlu0 %1737
    %1739 = vrot.lane.b32.xlu0 %v1706, 126
    %v1740 = vpop.permute.xlu0 %1739
    %1741 = vrot.lane.b32.xlu0 %v1707, 126
    %v1742 = vpop.permute.xlu0 %1741
    %1743 = vrot.lane.b32.xlu0 %v1708, 126
    %v1744 = vpop.permute.xlu0 %1743
    %1745 = vrot.lane.b32.xlu0 %v1709, 126
    %v1746 = vpop.permute.xlu0 %1745
    %1747 = vrot.lane.b32.xlu0 %v1710, 126
    %v1748 = vpop.permute.xlu0 %1747
    %1749 = vrot.lane.b32.xlu0 %v1711, 126
    %v1750 = vpop.permute.xlu0 %1749
    %1751 = vrot.lane.b32.xlu0 %v1712, 126
    %v1752 = vpop.permute.xlu0 %1751
    %1753 = vrot.lane.b32.xlu0 %v1713, 126
    %v1754 = vpop.permute.xlu0 %1753
    %1755 = vrot.lane.b32.xlu0 %v1714, 126
    %v1756 = vpop.permute.xlu0 %1755
    %1757 = vrot.lane.b32.xlu0 %v1715, 126
    %v1758 = vpop.permute.xlu0 %1757
    %1759 = vrot.lane.b32.xlu0 %v1716, 126
    %v1760 = vpop.permute.xlu0 %1759
    %1761 = vrot.lane.b32.xlu0 %v1717, 126
    %v1762 = vpop.permute.xlu0 %1761
    %1763 = vrot.lane.b32.xlu0 %v1718, 126
    %v1764 = vpop.permute.xlu0 %1763
    %1765 = vrot.lane.b32.xlu0 %v1719, 126
    %v1766 = vpop.permute.xlu0 %1765
    %1767 = vrot.lane.b32.xlu0 %v1720, 126
    %v1768 = vpop.permute.xlu0 %1767
    %v1785 = vadd.f32 %v1689, %v1738
    %v1786 = vadd.f32 %v1690, %v1740
    %v1787 = vadd.f32 %v1691, %v1742
    %v1788 = vadd.f32 %v1692, %v1744
    %v1789 = vadd.f32 %v1693, %v1746
    %v1790 = vadd.f32 %v1694, %v1748
    %v1791 = vadd.f32 %v1695, %v1750
    %v1792 = vadd.f32 %v1696, %v1752
    %v1793 = vadd.f32 %v1697, %v1754
    %v1794 = vadd.f32 %v1698, %v1756
    %v1795 = vadd.f32 %v1699, %v1758
    %v1796 = vadd.f32 %v1700, %v1760
    %v1797 = vadd.f32 %v1701, %v1762
    %v1798 = vadd.f32 %v1702, %v1764
    %v1799 = vadd.f32 %v1703, %v1766
    %v1800 = vadd.f32 %v1704, %v1768
    %v1801 = vmul.f32 %v489, 0.0352262
    %v1802 = vmul.f32 %v491, 0.0352262
    %v1803 = vmul.f32 %v493, 0.0352262
    %v1804 = vmul.f32 %v495, 0.0352262
    %v1805 = vmul.f32 %v497, 0.0352262
    %v1806 = vmul.f32 %v499, 0.0352262
    %v1807 = vmul.f32 %v501, 0.0352262
    %v1808 = vmul.f32 %v503, 0.0352262
    %v1809 = vmul.f32 %v921, -0.0854412
    %v1810 = vmul.f32 %v923, -0.0854412
    %v1811 = vmul.f32 %v925, -0.0854412
    %v1812 = vmul.f32 %v927, -0.0854412
    %v1813 = vmul.f32 %v929, -0.0854412
    %v1814 = vmul.f32 %v931, -0.0854412
    %v1815 = vmul.f32 %v933, -0.0854412
    %v1816 = vmul.f32 %v935, -0.0854412
    %v1817 = vadd.f32 %v1801, %v1809
    %v1818 = vadd.f32 %v1802, %v1810
    %v1819 = vadd.f32 %v1803, %v1811
    %v1820 = vadd.f32 %v1804, %v1812
    %v1821 = vadd.f32 %v1805, %v1813
    %v1822 = vadd.f32 %v1806, %v1814
    %v1823 = vadd.f32 %v1807, %v1815
    %v1824 = vadd.f32 %v1808, %v1816
    %v1825 = vmul.f32 %v489, -0.135011
    %v1826 = vmul.f32 %v490, -0.135011
    %v1827 = vmul.f32 %v491, -0.135011
    %v1828 = vmul.f32 %v492, -0.135011
    %v1829 = vmul.f32 %v493, -0.135011
    %v1830 = vmul.f32 %v494, -0.135011
    %v1831 = vmul.f32 %v495, -0.135011
    %v1832 = vmul.f32 %v496, -0.135011
    %v1833 = vmul.f32 %v497, -0.135011
    %v1834 = vmul.f32 %v498, -0.135011
    %v1835 = vmul.f32 %v499, -0.135011
    %v1836 = vmul.f32 %v500, -0.135011
    %v1837 = vmul.f32 %v501, -0.135011
    %v1838 = vmul.f32 %v502, -0.135011
    %v1839 = vmul.f32 %v503, -0.135011
    %v1840 = vmul.f32 %v504, -0.135011
    %vm1857 = vcmask 1046528
    %v1858 = vrot.slane %v1825, 1
    %v1859 = vrot.slane %v1826, 1
    %v1860 = vsel %vm1857, %v1858, %v1859
    %v1861 = vrot.slane %v1827, 1
    %v1862 = vrot.slane %v1828, 1
    %v1863 = vsel %vm1857, %v1861, %v1862
    %v1864 = vrot.slane %v1829, 1
    %v1865 = vrot.slane %v1830, 1
    %v1866 = vsel %vm1857, %v1864, %v1865
    %v1867 = vrot.slane %v1831, 1
    %v1868 = vrot.slane %v1832, 1
    %v1869 = vsel %vm1857, %v1867, %v1868
    %v1870 = vrot.slane %v1833, 1
    %v1871 = vrot.slane %v1834, 1
    %v1872 = vsel %vm1857, %v1870, %v1871
    %v1873 = vrot.slane %v1835, 1
    %v1874 = vrot.slane %v1836, 1
    %v1875 = vsel %vm1857, %v1873, %v1874
    %v1876 = vrot.slane %v1837, 1
    %v1877 = vrot.slane %v1838, 1
    %v1878 = vsel %vm1857, %v1876, %v1877
    %v1879 = vrot.slane %v1839, 1
    %v1880 = vrot.slane %v1840, 1
    %v1881 = vsel %vm1857, %v1879, %v1880
    %v1890 = vadd.f32 %v1817, %v1860
    %v1891 = vadd.f32 %v1818, %v1863
    %v1892 = vadd.f32 %v1819, %v1866
    %v1893 = vadd.f32 %v1820, %v1869
    %v1894 = vadd.f32 %v1821, %v1872
    %v1895 = vadd.f32 %v1822, %v1875
    %v1896 = vadd.f32 %v1823, %v1878
    %v1897 = vadd.f32 %v1824, %v1881
    %v1898 = vmul.f32 %v921, 0.4598775
    %v1899 = vmul.f32 %v922, 0.4598775
    %v1900 = vmul.f32 %v923, 0.4598775
    %v1901 = vmul.f32 %v924, 0.4598775
    %v1902 = vmul.f32 %v925, 0.4598775
    %v1903 = vmul.f32 %v926, 0.4598775
    %v1904 = vmul.f32 %v927, 0.4598775
    %v1905 = vmul.f32 %v928, 0.4598775
    %v1906 = vmul.f32 %v929, 0.4598775
    %v1907 = vmul.f32 %v930, 0.4598775
    %v1908 = vmul.f32 %v931, 0.4598775
    %v1909 = vmul.f32 %v932, 0.4598775
    %v1910 = vmul.f32 %v933, 0.4598775
    %v1911 = vmul.f32 %v934, 0.4598775
    %v1912 = vmul.f32 %v935, 0.4598775
    %v1913 = vmul.f32 %v936, 0.4598775
    %v1930 = vrot.slane %v1898, 1
    %v1931 = vrot.slane %v1899, 1
    %v1932 = vsel %vm1857, %v1930, %v1931
    %v1933 = vrot.slane %v1900, 1
    %v1934 = vrot.slane %v1901, 1
    %v1935 = vsel %vm1857, %v1933, %v1934
    %v1936 = vrot.slane %v1902, 1
    %v1937 = vrot.slane %v1903, 1
    %v1938 = vsel %vm1857, %v1936, %v1937
    %v1939 = vrot.slane %v1904, 1
    %v1940 = vrot.slane %v1905, 1
    %v1941 = vsel %vm1857, %v1939, %v1940
    %v1942 = vrot.slane %v1906, 1
    %v1943 = vrot.slane %v1907, 1
    %v1944 = vsel %vm1857, %v1942, %v1943
    %v1945 = vrot.slane %v1908, 1
    %v1946 = vrot.slane %v1909, 1
    %v1947 = vsel %vm1857, %v1945, %v1946
    %v1948 = vrot.slane %v1910, 1
    %v1949 = vrot.slane %v1911, 1
    %v1950 = vsel %vm1857, %v1948, %v1949
    %v1951 = vrot.slane %v1912, 1
    %v1952 = vrot.slane %v1913, 1
    %v1953 = vsel %vm1857, %v1951, %v1952
    %v1962 = vadd.f32 %v1890, %v1932
    %v1963 = vadd.f32 %v1891, %v1935
    %v1964 = vadd.f32 %v1892, %v1938
    %v1965 = vadd.f32 %v1893, %v1941
    %v1966 = vadd.f32 %v1894, %v1944
    %v1967 = vadd.f32 %v1895, %v1947
    %v1968 = vadd.f32 %v1896, %v1950
    %v1969 = vadd.f32 %v1897, %v1953
    %v1970 = vmul.f32 %v489, 0.8068915
    %v1971 = vmul.f32 %v490, 0.8068915
    %v1972 = vmul.f32 %v491, 0.8068915
    %v1973 = vmul.f32 %v492, 0.8068915
    %v1974 = vmul.f32 %v493, 0.8068915
    %v1975 = vmul.f32 %v494, 0.8068915
    %v1976 = vmul.f32 %v495, 0.8068915
    %v1977 = vmul.f32 %v496, 0.8068915
    %v1978 = vmul.f32 %v497, 0.8068915
    %v1979 = vmul.f32 %v498, 0.8068915
    %v1980 = vmul.f32 %v499, 0.8068915
    %v1981 = vmul.f32 %v500, 0.8068915
    %v1982 = vmul.f32 %v501, 0.8068915
    %v1983 = vmul.f32 %v502, 0.8068915
    %v1984 = vmul.f32 %v503, 0.8068915
    %v1985 = vmul.f32 %v504, 0.8068915
    %vm2002 = vcmask 1045504
    %v2003 = vrot.slane %v1970, 2
    %v2004 = vrot.slane %v1971, 2
    %v2005 = vsel %vm2002, %v2003, %v2004
    %v2006 = vrot.slane %v1972, 2
    %v2007 = vrot.slane %v1973, 2
    %v2008 = vsel %vm2002, %v2006, %v2007
    %v2009 = vrot.slane %v1974, 2
    %v2010 = vrot.slane %v1975, 2
    %v2011 = vsel %vm2002, %v2009, %v2010
    %v2012 = vrot.slane %v1976, 2
    %v2013 = vrot.slane %v1977, 2
    %v2014 = vsel %vm2002, %v2012, %v2013
    %v2015 = vrot.slane %v1978, 2
    %v2016 = vrot.slane %v1979, 2
    %v2017 = vsel %vm2002, %v2015, %v2016
    %v2018 = vrot.slane %v1980, 2
    %v2019 = vrot.slane %v1981, 2
    %v2020 = vsel %vm2002, %v2018, %v2019
    %v2021 = vrot.slane %v1982, 2
    %v2022 = vrot.slane %v1983, 2
    %v2023 = vsel %vm2002, %v2021, %v2022
    %v2024 = vrot.slane %v1984, 2
    %v2025 = vrot.slane %v1985, 2
    %v2026 = vsel %vm2002, %v2024, %v2025
    %v2035 = vadd.f32 %v1962, %v2005
    %v2036 = vadd.f32 %v1963, %v2008
    %v2037 = vadd.f32 %v1964, %v2011
    %v2038 = vadd.f32 %v1965, %v2014
    %v2039 = vadd.f32 %v1966, %v2017
    %v2040 = vadd.f32 %v1967, %v2020
    %v2041 = vadd.f32 %v1968, %v2023
    %v2042 = vadd.f32 %v1969, %v2026
    %v2043 = vmul.f32 %v921, 0.3326705
    %v2044 = vmul.f32 %v922, 0.3326705
    %v2045 = vmul.f32 %v923, 0.3326705
    %v2046 = vmul.f32 %v924, 0.3326705
    %v2047 = vmul.f32 %v925, 0.3326705
    %v2048 = vmul.f32 %v926, 0.3326705
    %v2049 = vmul.f32 %v927, 0.3326705
    %v2050 = vmul.f32 %v928, 0.3326705
    %v2051 = vmul.f32 %v929, 0.3326705
    %v2052 = vmul.f32 %v930, 0.3326705
    %v2053 = vmul.f32 %v931, 0.3326705
    %v2054 = vmul.f32 %v932, 0.3326705
    %v2055 = vmul.f32 %v933, 0.3326705
    %v2056 = vmul.f32 %v934, 0.3326705
    %v2057 = vmul.f32 %v935, 0.3326705
    %v2058 = vmul.f32 %v936, 0.3326705
    %v2075 = vrot.slane %v2043, 2
    %v2076 = vrot.slane %v2044, 2
    %v2077 = vsel %vm2002, %v2075, %v2076
    %v2078 = vrot.slane %v2045, 2
    %v2079 = vrot.slane %v2046, 2
    %v2080 = vsel %vm2002, %v2078, %v2079
    %v2081 = vrot.slane %v2047, 2
    %v2082 = vrot.slane %v2048, 2
    %v2083 = vsel %vm2002, %v2081, %v2082
    %v2084 = vrot.slane %v2049, 2
    %v2085 = vrot.slane %v2050, 2
    %v2086 = vsel %vm2002, %v2084, %v2085
    %v2087 = vrot.slane %v2051, 2
    %v2088 = vrot.slane %v2052, 2
    %v2089 = vsel %vm2002, %v2087, %v2088
    %v2090 = vrot.slane %v2053, 2
    %v2091 = vrot.slane %v2054, 2
    %v2092 = vsel %vm2002, %v2090, %v2091
    %v2093 = vrot.slane %v2055, 2
    %v2094 = vrot.slane %v2056, 2
    %v2095 = vsel %vm2002, %v2093, %v2094
    %v2096 = vrot.slane %v2057, 2
    %v2097 = vrot.slane %v2058, 2
    %v2098 = vsel %vm2002, %v2096, %v2097
    %v2107 = vadd.f32 %v2035, %v2077
    %v2108 = vadd.f32 %v2036, %v2080
    %v2109 = vadd.f32 %v2037, %v2083
    %v2110 = vadd.f32 %v2038, %v2086
    %v2111 = vadd.f32 %v2039, %v2089
    %v2112 = vadd.f32 %v2040, %v2092
    %v2113 = vadd.f32 %v2041, %v2095
    %v2114 = vadd.f32 %v2042, %v2098
    %vm2115 = vcmask 64512
    %2116 = vst.msk [vmem:[#allocation2] sm:$0xff] %vm2115, %v2107
    %2117 = vst.msk [vmem:[#allocation2 + $0x20] sm:$0xff] %vm2115, %v2108
    %2118 = vst.msk [vmem:[#allocation2 + $0x40] sm:$0xff] %vm2115, %v2109
    %2119 = vst.msk [vmem:[#allocation2 + $0x60] sm:$0xff] %vm2115, %v2110
    %2120 = vst.msk [vmem:[#allocation2 + $0x80] sm:$0xff] %vm2115, %v2111
    %2121 = vst.msk [vmem:[#allocation2 + $0xa0] sm:$0xff] %vm2115, %v2112
    %2122 = vst.msk [vmem:[#allocation2 + $0xc0] sm:$0xff] %vm2115, %v2113
    %2123 = vst.msk [vmem:[#allocation2 + $0xe0] sm:$0xff] %vm2115, %v2114
    %v2124 = vmul.f32 %v1353, 0.0352262
    %v2125 = vmul.f32 %v1355, 0.0352262
    %v2126 = vmul.f32 %v1357, 0.0352262
    %v2127 = vmul.f32 %v1359, 0.0352262
    %v2128 = vmul.f32 %v1361, 0.0352262
    %v2129 = vmul.f32 %v1363, 0.0352262
    %v2130 = vmul.f32 %v1365, 0.0352262
    %v2131 = vmul.f32 %v1367, 0.0352262
    %v2132 = vmul.f32 %v1785, -0.0854412
    %v2133 = vmul.f32 %v1787, -0.0854412
    %v2134 = vmul.f32 %v1789, -0.0854412
    %v2135 = vmul.f32 %v1791, -0.0854412
    %v2136 = vmul.f32 %v1793, -0.0854412
    %v2137 = vmul.f32 %v1795, -0.0854412
    %v2138 = vmul.f32 %v1797, -0.0854412
    %v2139 = vmul.f32 %v1799, -0.0854412
    %v2140 = vadd.f32 %v2124, %v2132
    %v2141 = vadd.f32 %v2125, %v2133
    %v2142 = vadd.f32 %v2126, %v2134
    %v2143 = vadd.f32 %v2127, %v2135
    %v2144 = vadd.f32 %v2128, %v2136
    %v2145 = vadd.f32 %v2129, %v2137
    %v2146 = vadd.f32 %v2130, %v2138
    %v2147 = vadd.f32 %v2131, %v2139
    %v2148 = vmul.f32 %v1353, -0.135011
    %v2149 = vmul.f32 %v1354, -0.135011
    %v2150 = vmul.f32 %v1355, -0.135011
    %v2151 = vmul.f32 %v1356, -0.135011
    %v2152 = vmul.f32 %v1357, -0.135011
    %v2153 = vmul.f32 %v1358, -0.135011
    %v2154 = vmul.f32 %v1359, -0.135011
    %v2155 = vmul.f32 %v1360, -0.135011
    %v2156 = vmul.f32 %v1361, -0.135011
    %v2157 = vmul.f32 %v1362, -0.135011
    %v2158 = vmul.f32 %v1363, -0.135011
    %v2159 = vmul.f32 %v1364, -0.135011
    %v2160 = vmul.f32 %v1365, -0.135011
    %v2161 = vmul.f32 %v1366, -0.135011
    %v2162 = vmul.f32 %v1367, -0.135011
    %v2163 = vmul.f32 %v1368, -0.135011
    %v2180 = vrot.slane %v2148, 1
    %v2181 = vrot.slane %v2149, 1
    %v2182 = vsel %vm1857, %v2180, %v2181
    %v2183 = vrot.slane %v2150, 1
    %v2184 = vrot.slane %v2151, 1
    %v2185 = vsel %vm1857, %v2183, %v2184
    %v2186 = vrot.slane %v2152, 1
    %v2187 = vrot.slane %v2153, 1
    %v2188 = vsel %vm1857, %v2186, %v2187
    %v2189 = vrot.slane %v2154, 1
    %v2190 = vrot.slane %v2155, 1
    %v2191 = vsel %vm1857, %v2189, %v2190
    %v2192 = vrot.slane %v2156, 1
    %v2193 = vrot.slane %v2157, 1
    %v2194 = vsel %vm1857, %v2192, %v2193
    %v2195 = vrot.slane %v2158, 1
    %v2196 = vrot.slane %v2159, 1
    %v2197 = vsel %vm1857, %v2195, %v2196
    %v2198 = vrot.slane %v2160, 1
    %v2199 = vrot.slane %v2161, 1
    %v2200 = vsel %vm1857, %v2198, %v2199
    %v2201 = vrot.slane %v2162, 1
    %v2202 = vrot.slane %v2163, 1
    %v2203 = vsel %vm1857, %v2201, %v2202
    %v2212 = vadd.f32 %v2140, %v2182
    %v2213 = vadd.f32 %v2141, %v2185
    %v2214 = vadd.f32 %v2142, %v2188
    %v2215 = vadd.f32 %v2143, %v2191
    %v2216 = vadd.f32 %v2144, %v2194
    %v2217 = vadd.f32 %v2145, %v2197
    %v2218 = vadd.f32 %v2146, %v2200
    %v2219 = vadd.f32 %v2147, %v2203
    %v2220 = vmul.f32 %v1785, 0.4598775
    %v2221 = vmul.f32 %v1786, 0.4598775
    %v2222 = vmul.f32 %v1787, 0.4598775
    %v2223 = vmul.f32 %v1788, 0.4598775
    %v2224 = vmul.f32 %v1789, 0.4598775
    %v2225 = vmul.f32 %v1790, 0.4598775
    %v2226 = vmul.f32 %v1791, 0.4598775
    %v2227 = vmul.f32 %v1792, 0.4598775
    %v2228 = vmul.f32 %v1793, 0.4598775
    %v2229 = vmul.f32 %v1794, 0.4598775
    %v2230 = vmul.f32 %v1795, 0.4598775
    %v2231 = vmul.f32 %v1796, 0.4598775
    %v2232 = vmul.f32 %v1797, 0.4598775
    %v2233 = vmul.f32 %v1798, 0.4598775
    %v2234 = vmul.f32 %v1799, 0.4598775
    %v2235 = vmul.f32 %v1800, 0.4598775
    %v2252 = vrot.slane %v2220, 1
    %v2253 = vrot.slane %v2221, 1
    %v2254 = vsel %vm1857, %v2252, %v2253
    %v2255 = vrot.slane %v2222, 1
    %v2256 = vrot.slane %v2223, 1
    %v2257 = vsel %vm1857, %v2255, %v2256
    %v2258 = vrot.slane %v2224, 1
    %v2259 = vrot.slane %v2225, 1
    %v2260 = vsel %vm1857, %v2258, %v2259
    %v2261 = vrot.slane %v2226, 1
    %v2262 = vrot.slane %v2227, 1
    %v2263 = vsel %vm1857, %v2261, %v2262
    %v2264 = vrot.slane %v2228, 1
    %v2265 = vrot.slane %v2229, 1
    %v2266 = vsel %vm1857, %v2264, %v2265
    %v2267 = vrot.slane %v2230, 1
    %v2268 = vrot.slane %v2231, 1
    %v2269 = vsel %vm1857, %v2267, %v2268
    %v2270 = vrot.slane %v2232, 1
    %v2271 = vrot.slane %v2233, 1
    %v2272 = vsel %vm1857, %v2270, %v2271
    %v2273 = vrot.slane %v2234, 1
    %v2274 = vrot.slane %v2235, 1
    %v2275 = vsel %vm1857, %v2273, %v2274
    %v2284 = vadd.f32 %v2212, %v2254
    %v2285 = vadd.f32 %v2213, %v2257
    %v2286 = vadd.f32 %v2214, %v2260
    %v2287 = vadd.f32 %v2215, %v2263
    %v2288 = vadd.f32 %v2216, %v2266
    %v2289 = vadd.f32 %v2217, %v2269
    %v2290 = vadd.f32 %v2218, %v2272
    %v2291 = vadd.f32 %v2219, %v2275
    %v2292 = vmul.f32 %v1353, 0.8068915
    %v2293 = vmul.f32 %v1354, 0.8068915
    %v2294 = vmul.f32 %v1355, 0.8068915
    %v2295 = vmul.f32 %v1356, 0.8068915
    %v2296 = vmul.f32 %v1357, 0.8068915
    %v2297 = vmul.f32 %v1358, 0.8068915
    %v2298 = vmul.f32 %v1359, 0.8068915
    %v2299 = vmul.f32 %v1360, 0.8068915
    %v2300 = vmul.f32 %v1361, 0.8068915
    %v2301 = vmul.f32 %v1362, 0.8068915
    %v2302 = vmul.f32 %v1363, 0.8068915
    %v2303 = vmul.f32 %v1364, 0.8068915
    %v2304 = vmul.f32 %v1365, 0.8068915
    %v2305 = vmul.f32 %v1366, 0.8068915
    %v2306 = vmul.f32 %v1367, 0.8068915
    %v2307 = vmul.f32 %v1368, 0.8068915
    %v2324 = vrot.slane %v2292, 2
    %v2325 = vrot.slane %v2293, 2
    %v2326 = vsel %vm2002, %v2324, %v2325
    %v2327 = vrot.slane %v2294, 2
    %v2328 = vrot.slane %v2295, 2
    %v2329 = vsel %vm2002, %v2327, %v2328
    %v2330 = vrot.slane %v2296, 2
    %v2331 = vrot.slane %v2297, 2
    %v2332 = vsel %vm2002, %v2330, %v2331
    %v2333 = vrot.slane %v2298, 2
    %v2334 = vrot.slane %v2299, 2
    %v2335 = vsel %vm2002, %v2333, %v2334
    %v2336 = vrot.slane %v2300, 2
    %v2337 = vrot.slane %v2301, 2
    %v2338 = vsel %vm2002, %v2336, %v2337
    %v2339 = vrot.slane %v2302, 2
    %v2340 = vrot.slane %v2303, 2
    %v2341 = vsel %vm2002, %v2339, %v2340
    %v2342 = vrot.slane %v2304, 2
    %v2343 = vrot.slane %v2305, 2
    %v2344 = vsel %vm2002, %v2342, %v2343
    %v2345 = vrot.slane %v2306, 2
    %v2346 = vrot.slane %v2307, 2
    %v2347 = vsel %vm2002, %v2345, %v2346
    %v2356 = vadd.f32 %v2284, %v2326
    %v2357 = vadd.f32 %v2285, %v2329
    %v2358 = vadd.f32 %v2286, %v2332
    %v2359 = vadd.f32 %v2287, %v2335
    %v2360 = vadd.f32 %v2288, %v2338
    %v2361 = vadd.f32 %v2289, %v2341
    %v2362 = vadd.f32 %v2290, %v2344
    %v2363 = vadd.f32 %v2291, %v2347
    %v2364 = vmul.f32 %v1785, 0.3326705
    %v2365 = vmul.f32 %v1786, 0.3326705
    %v2366 = vmul.f32 %v1787, 0.3326705
    %v2367 = vmul.f32 %v1788, 0.3326705
    %v2368 = vmul.f32 %v1789, 0.3326705
    %v2369 = vmul.f32 %v1790, 0.3326705
    %v2370 = vmul.f32 %v1791, 0.3326705
    %v2371 = vmul.f32 %v1792, 0.3326705
    %v2372 = vmul.f32 %v1793, 0.3326705
    %v2373 = vmul.f32 %v1794, 0.3326705
    %v2374 = vmul.f32 %v1795, 0.3326705
    %v2375 = vmul.f32 %v1796, 0.3326705
    %v2376 = vmul.f32 %v1797, 0.3326705
    %v2377 = vmul.f32 %v1798, 0.3326705
    %v2378 = vmul.f32 %v1799, 0.3326705
    %v2379 = vmul.f32 %v1800, 0.3326705
    %v2396 = vrot.slane %v2364, 2
    %v2397 = vrot.slane %v2365, 2
    %v2398 = vsel %vm2002, %v2396, %v2397
    %v2399 = vrot.slane %v2366, 2
    %v2400 = vrot.slane %v2367, 2
    %v2401 = vsel %vm2002, %v2399, %v2400
    %v2402 = vrot.slane %v2368, 2
    %v2403 = vrot.slane %v2369, 2
    %v2404 = vsel %vm2002, %v2402, %v2403
    %v2405 = vrot.slane %v2370, 2
    %v2406 = vrot.slane %v2371, 2
    %v2407 = vsel %vm2002, %v2405, %v2406
    %v2408 = vrot.slane %v2372, 2
    %v2409 = vrot.slane %v2373, 2
    %v2410 = vsel %vm2002, %v2408, %v2409
    %v2411 = vrot.slane %v2374, 2
    %v2412 = vrot.slane %v2375, 2
    %v2413 = vsel %vm2002, %v2411, %v2412
    %v2414 = vrot.slane %v2376, 2
    %v2415 = vrot.slane %v2377, 2
    %v2416 = vsel %vm2002, %v2414, %v2415
    %v2417 = vrot.slane %v2378, 2
    %v2418 = vrot.slane %v2379, 2
    %v2419 = vsel %vm2002, %v2417, %v2418
    %v2428 = vadd.f32 %v2356, %v2398
    %v2429 = vadd.f32 %v2357, %v2401
    %v2430 = vadd.f32 %v2358, %v2404
    %v2431 = vadd.f32 %v2359, %v2407
    %v2432 = vadd.f32 %v2360, %v2410
    %v2433 = vadd.f32 %v2361, %v2413
    %v2434 = vadd.f32 %v2362, %v2416
    %v2435 = vadd.f32 %v2363, %v2419
    %s2436 = scalar_lea.vmem [#allocation2], 8
    %2437 = vst.msk [vmem:[%s2436] sm:$0xff] %vm2115, %v2428
    %2438 = vst.msk [vmem:[%s2436 + $0x20] sm:$0xff] %vm2115, %v2429
    %2439 = vst.msk [vmem:[%s2436 + $0x40] sm:$0xff] %vm2115, %v2430
    %2440 = vst.msk [vmem:[%s2436 + $0x60] sm:$0xff] %vm2115, %v2431
    %2441 = vst.msk [vmem:[%s2436 + $0x80] sm:$0xff] %vm2115, %v2432
    %2442 = vst.msk [vmem:[%s2436 + $0xa0] sm:$0xff] %vm2115, %v2433
    %2443 = vst.msk [vmem:[%s2436 + $0xc0] sm:$0xff] %vm2115, %v2434
    %2444 = vst.msk [vmem:[%s2436 + $0xe0] sm:$0xff] %vm2115, %v2435
    %v2445 = vmul.f32 %v489, -0.3326705
    %v2446 = vmul.f32 %v491, -0.3326705
    %v2447 = vmul.f32 %v493, -0.3326705
    %v2448 = vmul.f32 %v495, -0.3326705
    %v2449 = vmul.f32 %v497, -0.3326705
    %v2450 = vmul.f32 %v499, -0.3326705
    %v2451 = vmul.f32 %v501, -0.3326705
    %v2452 = vmul.f32 %v503, -0.3326705
    %v2453 = vmul.f32 %v921, 0.8068915
    %v2454 = vmul.f32 %v923, 0.8068915
    %v2455 = vmul.f32 %v925, 0.8068915
    %v2456 = vmul.f32 %v927, 0.8068915
    %v2457 = vmul.f32 %v929, 0.8068915
    %v2458 = vmul.f32 %v931, 0.8068915
    %v2459 = vmul.f32 %v933, 0.8068915
    %v2460 = vmul.f32 %v935, 0.8068915
    %v2461 = vadd.f32 %v2445, %v2453
    %v2462 = vadd.f32 %v2446, %v2454
    %v2463 = vadd.f32 %v2447, %v2455
    %v2464 = vadd.f32 %v2448, %v2456
    %v2465 = vadd.f32 %v2449, %v2457
    %v2466 = vadd.f32 %v2450, %v2458
    %v2467 = vadd.f32 %v2451, %v2459
    %v2468 = vadd.f32 %v2452, %v2460
    %v2469 = vmul.f32 %v489, -0.4598775
    %v2470 = vmul.f32 %v490, -0.4598775
    %v2471 = vmul.f32 %v491, -0.4598775
    %v2472 = vmul.f32 %v492, -0.4598775
    %v2473 = vmul.f32 %v493, -0.4598775
    %v2474 = vmul.f32 %v494, -0.4598775
    %v2475 = vmul.f32 %v495, -0.4598775
    %v2476 = vmul.f32 %v496, -0.4598775
    %v2477 = vmul.f32 %v497, -0.4598775
    %v2478 = vmul.f32 %v498, -0.4598775
    %v2479 = vmul.f32 %v499, -0.4598775
    %v2480 = vmul.f32 %v500, -0.4598775
    %v2481 = vmul.f32 %v501, -0.4598775
    %v2482 = vmul.f32 %v502, -0.4598775
    %v2483 = vmul.f32 %v503, -0.4598775
    %v2484 = vmul.f32 %v504, -0.4598775
    %v2501 = vrot.slane %v2469, 1
    %v2502 = vrot.slane %v2470, 1
    %v2503 = vsel %vm1857, %v2501, %v2502
    %v2504 = vrot.slane %v2471, 1
    %v2505 = vrot.slane %v2472, 1
    %v2506 = vsel %vm1857, %v2504, %v2505
    %v2507 = vrot.slane %v2473, 1
    %v2508 = vrot.slane %v2474, 1
    %v2509 = vsel %vm1857, %v2507, %v2508
    %v2510 = vrot.slane %v2475, 1
    %v2511 = vrot.slane %v2476, 1
    %v2512 = vsel %vm1857, %v2510, %v2511
    %v2513 = vrot.slane %v2477, 1
    %v2514 = vrot.slane %v2478, 1
    %v2515 = vsel %vm1857, %v2513, %v2514
    %v2516 = vrot.slane %v2479, 1
    %v2517 = vrot.slane %v2480, 1
    %v2518 = vsel %vm1857, %v2516, %v2517
    %v2519 = vrot.slane %v2481, 1
    %v2520 = vrot.slane %v2482, 1
    %v2521 = vsel %vm1857, %v2519, %v2520
    %v2522 = vrot.slane %v2483, 1
    %v2523 = vrot.slane %v2484, 1
    %v2524 = vsel %vm1857, %v2522, %v2523
    %v2533 = vadd.f32 %v2461, %v2503
    %v2534 = vadd.f32 %v2462, %v2506
    %v2535 = vadd.f32 %v2463, %v2509
    %v2536 = vadd.f32 %v2464, %v2512
    %v2537 = vadd.f32 %v2465, %v2515
    %v2538 = vadd.f32 %v2466, %v2518
    %v2539 = vadd.f32 %v2467, %v2521
    %v2540 = vadd.f32 %v2468, %v2524
    %v2541 = vmul.f32 %v921, -0.135011
    %v2542 = vmul.f32 %v922, -0.135011
    %v2543 = vmul.f32 %v923, -0.135011
    %v2544 = vmul.f32 %v924, -0.135011
    %v2545 = vmul.f32 %v925, -0.135011
    %v2546 = vmul.f32 %v926, -0.135011
    %v2547 = vmul.f32 %v927, -0.135011
    %v2548 = vmul.f32 %v928, -0.135011
    %v2549 = vmul.f32 %v929, -0.135011
    %v2550 = vmul.f32 %v930, -0.135011
    %v2551 = vmul.f32 %v931, -0.135011
    %v2552 = vmul.f32 %v932, -0.135011
    %v2553 = vmul.f32 %v933, -0.135011
    %v2554 = vmul.f32 %v934, -0.135011
    %v2555 = vmul.f32 %v935, -0.135011
    %v2556 = vmul.f32 %v936, -0.135011
    %v2573 = vrot.slane %v2541, 1
    %v2574 = vrot.slane %v2542, 1
    %v2575 = vsel %vm1857, %v2573, %v2574
    %v2576 = vrot.slane %v2543, 1
    %v2577 = vrot.slane %v2544, 1
    %v2578 = vsel %vm1857, %v2576, %v2577
    %v2579 = vrot.slane %v2545, 1
    %v2580 = vrot.slane %v2546, 1
    %v2581 = vsel %vm1857, %v2579, %v2580
    %v2582 = vrot.slane %v2547, 1
    %v2583 = vrot.slane %v2548, 1
    %v2584 = vsel %vm1857, %v2582, %v2583
    %v2585 = vrot.slane %v2549, 1
    %v2586 = vrot.slane %v2550, 1
    %v2587 = vsel %vm1857, %v2585, %v2586
    %v2588 = vrot.slane %v2551, 1
    %v2589 = vrot.slane %v2552, 1
    %v2590 = vsel %vm1857, %v2588, %v2589
    %v2591 = vrot.slane %v2553, 1
    %v2592 = vrot.slane %v2554, 1
    %v2593 = vsel %vm1857, %v2591, %v2592
    %v2594 = vrot.slane %v2555, 1
    %v2595 = vrot.slane %v2556, 1
    %v2596 = vsel %vm1857, %v2594, %v2595
    %v2605 = vadd.f32 %v2533, %v2575
    %v2606 = vadd.f32 %v2534, %v2578
    %v2607 = vadd.f32 %v2535, %v2581
    %v2608 = vadd.f32 %v2536, %v2584
    %v2609 = vadd.f32 %v2537, %v2587
    %v2610 = vadd.f32 %v2538, %v2590
    %v2611 = vadd.f32 %v2539, %v2593
    %v2612 = vadd.f32 %v2540, %v2596
    %v2613 = vmul.f32 %v489, 0.0854412
    %v2614 = vmul.f32 %v490, 0.0854412
    %v2615 = vmul.f32 %v491, 0.0854412
    %v2616 = vmul.f32 %v492, 0.0854412
    %v2617 = vmul.f32 %v493, 0.0854412
    %v2618 = vmul.f32 %v494, 0.0854412
    %v2619 = vmul.f32 %v495, 0.0854412
    %v2620 = vmul.f32 %v496, 0.0854412
    %v2621 = vmul.f32 %v497, 0.0854412
    %v2622 = vmul.f32 %v498, 0.0854412
    %v2623 = vmul.f32 %v499, 0.0854412
    %v2624 = vmul.f32 %v500, 0.0854412
    %v2625 = vmul.f32 %v501, 0.0854412
    %v2626 = vmul.f32 %v502, 0.0854412
    %v2627 = vmul.f32 %v503, 0.0854412
    %v2628 = vmul.f32 %v504, 0.0854412
    %v2645 = vrot.slane %v2613, 2
    %v2646 = vrot.slane %v2614, 2
    %v2647 = vsel %vm2002, %v2645, %v2646
    %v2648 = vrot.slane %v2615, 2
    %v2649 = vrot.slane %v2616, 2
    %v2650 = vsel %vm2002, %v2648, %v2649
    %v2651 = vrot.slane %v2617, 2
    %v2652 = vrot.slane %v2618, 2
    %v2653 = vsel %vm2002, %v2651, %v2652
    %v2654 = vrot.slane %v2619, 2
    %v2655 = vrot.slane %v2620, 2
    %v2656 = vsel %vm2002, %v2654, %v2655
    %v2657 = vrot.slane %v2621, 2
    %v2658 = vrot.slane %v2622, 2
    %v2659 = vsel %vm2002, %v2657, %v2658
    %v2660 = vrot.slane %v2623, 2
    %v2661 = vrot.slane %v2624, 2
    %v2662 = vsel %vm2002, %v2660, %v2661
    %v2663 = vrot.slane %v2625, 2
    %v2664 = vrot.slane %v2626, 2
    %v2665 = vsel %vm2002, %v2663, %v2664
    %v2666 = vrot.slane %v2627, 2
    %v2667 = vrot.slane %v2628, 2
    %v2668 = vsel %vm2002, %v2666, %v2667
    %v2677 = vadd.f32 %v2605, %v2647
    %v2678 = vadd.f32 %v2606, %v2650
    %v2679 = vadd.f32 %v2607, %v2653
    %v2680 = vadd.f32 %v2608, %v2656
    %v2681 = vadd.f32 %v2609, %v2659
    %v2682 = vadd.f32 %v2610, %v2662
    %v2683 = vadd.f32 %v2611, %v2665
    %v2684 = vadd.f32 %v2612, %v2668
    %v2685 = vmul.f32 %v921, 0.0352262
    %v2686 = vmul.f32 %v922, 0.0352262
    %v2687 = vmul.f32 %v923, 0.0352262
    %v2688 = vmul.f32 %v924, 0.0352262
    %v2689 = vmul.f32 %v925, 0.0352262
    %v2690 = vmul.f32 %v926, 0.0352262
    %v2691 = vmul.f32 %v927, 0.0352262
    %v2692 = vmul.f32 %v928, 0.0352262
    %v2693 = vmul.f32 %v929, 0.0352262
    %v2694 = vmul.f32 %v930, 0.0352262
    %v2695 = vmul.f32 %v931, 0.0352262
    %v2696 = vmul.f32 %v932, 0.0352262
    %v2697 = vmul.f32 %v933, 0.0352262
    %v2698 = vmul.f32 %v934, 0.0352262
    %v2699 = vmul.f32 %v935, 0.0352262
    %v2700 = vmul.f32 %v936, 0.0352262
    %v2717 = vrot.slane %v2685, 2
    %v2718 = vrot.slane %v2686, 2
    %v2719 = vsel %vm2002, %v2717, %v2718
    %v2720 = vrot.slane %v2687, 2
    %v2721 = vrot.slane %v2688, 2
    %v2722 = vsel %vm2002, %v2720, %v2721
    %v2723 = vrot.slane %v2689, 2
    %v2724 = vrot.slane %v2690, 2
    %v2725 = vsel %vm2002, %v2723, %v2724
    %v2726 = vrot.slane %v2691, 2
    %v2727 = vrot.slane %v2692, 2
    %v2728 = vsel %vm2002, %v2726, %v2727
    %v2729 = vrot.slane %v2693, 2
    %v2730 = vrot.slane %v2694, 2
    %v2731 = vsel %vm2002, %v2729, %v2730
    %v2732 = vrot.slane %v2695, 2
    %v2733 = vrot.slane %v2696, 2
    %v2734 = vsel %vm2002, %v2732, %v2733
    %v2735 = vrot.slane %v2697, 2
    %v2736 = vrot.slane %v2698, 2
    %v2737 = vsel %vm2002, %v2735, %v2736
    %v2738 = vrot.slane %v2699, 2
    %v2739 = vrot.slane %v2700, 2
    %v2740 = vsel %vm2002, %v2738, %v2739
    %v2749 = vadd.f32 %v2677, %v2719
    %v2750 = vadd.f32 %v2678, %v2722
    %v2751 = vadd.f32 %v2679, %v2725
    %v2752 = vadd.f32 %v2680, %v2728
    %v2753 = vadd.f32 %v2681, %v2731
    %v2754 = vadd.f32 %v2682, %v2734
    %v2755 = vadd.f32 %v2683, %v2737
    %v2756 = vadd.f32 %v2684, %v2740
    %s2757 = scalar_lea.vmem [#allocation2], 16
    %2758 = vst.msk [vmem:[%s2757] sm:$0xff] %vm2115, %v2749
    %2759 = vst.msk [vmem:[%s2757 + $0x20] sm:$0xff] %vm2115, %v2750
    %2760 = vst.msk [vmem:[%s2757 + $0x40] sm:$0xff] %vm2115, %v2751
    %2761 = vst.msk [vmem:[%s2757 + $0x60] sm:$0xff] %vm2115, %v2752
    %2762 = vst.msk [vmem:[%s2757 + $0x80] sm:$0xff] %vm2115, %v2753
    %2763 = vst.msk [vmem:[%s2757 + $0xa0] sm:$0xff] %vm2115, %v2754
    %2764 = vst.msk [vmem:[%s2757 + $0xc0] sm:$0xff] %vm2115, %v2755
    %2765 = vst.msk [vmem:[%s2757 + $0xe0] sm:$0xff] %vm2115, %v2756
    %v2766 = vmul.f32 %v1353, -0.3326705
    %v2767 = vmul.f32 %v1355, -0.3326705
    %v2768 = vmul.f32 %v1357, -0.3326705
    %v2769 = vmul.f32 %v1359, -0.3326705
    %v2770 = vmul.f32 %v1361, -0.3326705
    %v2771 = vmul.f32 %v1363, -0.3326705
    %v2772 = vmul.f32 %v1365, -0.3326705
    %v2773 = vmul.f32 %v1367, -0.3326705
    %v2774 = vmul.f32 %v1785, 0.8068915
    %v2775 = vmul.f32 %v1787, 0.8068915
    %v2776 = vmul.f32 %v1789, 0.8068915
    %v2777 = vmul.f32 %v1791, 0.8068915
    %v2778 = vmul.f32 %v1793, 0.8068915
    %v2779 = vmul.f32 %v1795, 0.8068915
    %v2780 = vmul.f32 %v1797, 0.8068915
    %v2781 = vmul.f32 %v1799, 0.8068915
    %v2782 = vadd.f32 %v2766, %v2774
    %v2783 = vadd.f32 %v2767, %v2775
    %v2784 = vadd.f32 %v2768, %v2776
    %v2785 = vadd.f32 %v2769, %v2777
    %v2786 = vadd.f32 %v2770, %v2778
    %v2787 = vadd.f32 %v2771, %v2779
    %v2788 = vadd.f32 %v2772, %v2780
    %v2789 = vadd.f32 %v2773, %v2781
    %v2790 = vmul.f32 %v1353, -0.4598775
    %v2791 = vmul.f32 %v1354, -0.4598775
    %v2792 = vmul.f32 %v1355, -0.4598775
    %v2793 = vmul.f32 %v1356, -0.4598775
    %v2794 = vmul.f32 %v1357, -0.4598775
    %v2795 = vmul.f32 %v1358, -0.4598775
    %v2796 = vmul.f32 %v1359, -0.4598775
    %v2797 = vmul.f32 %v1360, -0.4598775
    %v2798 = vmul.f32 %v1361, -0.4598775
    %v2799 = vmul.f32 %v1362, -0.4598775
    %v2800 = vmul.f32 %v1363, -0.4598775
    %v2801 = vmul.f32 %v1364, -0.4598775
    %v2802 = vmul.f32 %v1365, -0.4598775
    %v2803 = vmul.f32 %v1366, -0.4598775
    %v2804 = vmul.f32 %v1367, -0.4598775
    %v2805 = vmul.f32 %v1368, -0.4598775
    %v2822 = vrot.slane %v2790, 1
    %v2823 = vrot.slane %v2791, 1
    %v2824 = vsel %vm1857, %v2822, %v2823
    %v2825 = vrot.slane %v2792, 1
    %v2826 = vrot.slane %v2793, 1
    %v2827 = vsel %vm1857, %v2825, %v2826
    %v2828 = vrot.slane %v2794, 1
    %v2829 = vrot.slane %v2795, 1
    %v2830 = vsel %vm1857, %v2828, %v2829
    %v2831 = vrot.slane %v2796, 1
    %v2832 = vrot.slane %v2797, 1
    %v2833 = vsel %vm1857, %v2831, %v2832
    %v2834 = vrot.slane %v2798, 1
    %v2835 = vrot.slane %v2799, 1
    %v2836 = vsel %vm1857, %v2834, %v2835
    %v2837 = vrot.slane %v2800, 1
    %v2838 = vrot.slane %v2801, 1
    %v2839 = vsel %vm1857, %v2837, %v2838
    %v2840 = vrot.slane %v2802, 1
    %v2841 = vrot.slane %v2803, 1
    %v2842 = vsel %vm1857, %v2840, %v2841
    %v2843 = vrot.slane %v2804, 1
    %v2844 = vrot.slane %v2805, 1
    %v2845 = vsel %vm1857, %v2843, %v2844
    %v2854 = vadd.f32 %v2782, %v2824
    %v2855 = vadd.f32 %v2783, %v2827
    %v2856 = vadd.f32 %v2784, %v2830
    %v2857 = vadd.f32 %v2785, %v2833
    %v2858 = vadd.f32 %v2786, %v2836
    %v2859 = vadd.f32 %v2787, %v2839
    %v2860 = vadd.f32 %v2788, %v2842
    %v2861 = vadd.f32 %v2789, %v2845
    %v2862 = vmul.f32 %v1785, -0.135011
    %v2863 = vmul.f32 %v1786, -0.135011
    %v2864 = vmul.f32 %v1787, -0.135011
    %v2865 = vmul.f32 %v1788, -0.135011
    %v2866 = vmul.f32 %v1789, -0.135011
    %v2867 = vmul.f32 %v1790, -0.135011
    %v2868 = vmul.f32 %v1791, -0.135011
    %v2869 = vmul.f32 %v1792, -0.135011
    %v2870 = vmul.f32 %v1793, -0.135011
    %v2871 = vmul.f32 %v1794, -0.135011
    %v2872 = vmul.f32 %v1795, -0.135011
    %v2873 = vmul.f32 %v1796, -0.135011
    %v2874 = vmul.f32 %v1797, -0.135011
    %v2875 = vmul.f32 %v1798, -0.135011
    %v2876 = vmul.f32 %v1799, -0.135011
    %v2877 = vmul.f32 %v1800, -0.135011
    %v2894 = vrot.slane %v2862, 1
    %v2895 = vrot.slane %v2863, 1
    %v2896 = vsel %vm1857, %v2894, %v2895
    %v2897 = vrot.slane %v2864, 1
    %v2898 = vrot.slane %v2865, 1
    %v2899 = vsel %vm1857, %v2897, %v2898
    %v2900 = vrot.slane %v2866, 1
    %v2901 = vrot.slane %v2867, 1
    %v2902 = vsel %vm1857, %v2900, %v2901
    %v2903 = vrot.slane %v2868, 1
    %v2904 = vrot.slane %v2869, 1
    %v2905 = vsel %vm1857, %v2903, %v2904
    %v2906 = vrot.slane %v2870, 1
    %v2907 = vrot.slane %v2871, 1
    %v2908 = vsel %vm1857, %v2906, %v2907
    %v2909 = vrot.slane %v2872, 1
    %v2910 = vrot.slane %v2873, 1
    %v2911 = vsel %vm1857, %v2909, %v2910
    %v2912 = vrot.slane %v2874, 1
    %v2913 = vrot.slane %v2875, 1
    %v2914 = vsel %vm1857, %v2912, %v2913
    %v2915 = vrot.slane %v2876, 1
    %v2916 = vrot.slane %v2877, 1
    %v2917 = vsel %vm1857, %v2915, %v2916
    %v2926 = vadd.f32 %v2854, %v2896
    %v2927 = vadd.f32 %v2855, %v2899
    %v2928 = vadd.f32 %v2856, %v2902
    %v2929 = vadd.f32 %v2857, %v2905
    %v2930 = vadd.f32 %v2858, %v2908
    %v2931 = vadd.f32 %v2859, %v2911
    %v2932 = vadd.f32 %v2860, %v2914
    %v2933 = vadd.f32 %v2861, %v2917
    %v2934 = vmul.f32 %v1353, 0.0854412
    %v2935 = vmul.f32 %v1354, 0.0854412
    %v2936 = vmul.f32 %v1355, 0.0854412
    %v2937 = vmul.f32 %v1356, 0.0854412
    %v2938 = vmul.f32 %v1357, 0.0854412
    %v2939 = vmul.f32 %v1358, 0.0854412
    %v2940 = vmul.f32 %v1359, 0.0854412
    %v2941 = vmul.f32 %v1360, 0.0854412
    %v2942 = vmul.f32 %v1361, 0.0854412
    %v2943 = vmul.f32 %v1362, 0.0854412
    %v2944 = vmul.f32 %v1363, 0.0854412
    %v2945 = vmul.f32 %v1364, 0.0854412
    %v2946 = vmul.f32 %v1365, 0.0854412
    %v2947 = vmul.f32 %v1366, 0.0854412
    %v2948 = vmul.f32 %v1367, 0.0854412
    %v2949 = vmul.f32 %v1368, 0.0854412
    %v2966 = vrot.slane %v2934, 2
    %v2967 = vrot.slane %v2935, 2
    %v2968 = vsel %vm2002, %v2966, %v2967
    %v2969 = vrot.slane %v2936, 2
    %v2970 = vrot.slane %v2937, 2
    %v2971 = vsel %vm2002, %v2969, %v2970
    %v2972 = vrot.slane %v2938, 2
    %v2973 = vrot.slane %v2939, 2
    %v2974 = vsel %vm2002, %v2972, %v2973
    %v2975 = vrot.slane %v2940, 2
    %v2976 = vrot.slane %v2941, 2
    %v2977 = vsel %vm2002, %v2975, %v2976
    %v2978 = vrot.slane %v2942, 2
    %v2979 = vrot.slane %v2943, 2
    %v2980 = vsel %vm2002, %v2978, %v2979
    %v2981 = vrot.slane %v2944, 2
    %v2982 = vrot.slane %v2945, 2
    %v2983 = vsel %vm2002, %v2981, %v2982
    %v2984 = vrot.slane %v2946, 2
    %v2985 = vrot.slane %v2947, 2
    %v2986 = vsel %vm2002, %v2984, %v2985
    %v2987 = vrot.slane %v2948, 2
    %v2988 = vrot.slane %v2949, 2
    %v2989 = vsel %vm2002, %v2987, %v2988
    %v2998 = vadd.f32 %v2926, %v2968
    %v2999 = vadd.f32 %v2927, %v2971
    %v3000 = vadd.f32 %v2928, %v2974
    %v3001 = vadd.f32 %v2929, %v2977
    %v3002 = vadd.f32 %v2930, %v2980
    %v3003 = vadd.f32 %v2931, %v2983
    %v3004 = vadd.f32 %v2932, %v2986
    %v3005 = vadd.f32 %v2933, %v2989
    %v3006 = vmul.f32 %v1785, 0.0352262
    %v3007 = vmul.f32 %v1786, 0.0352262
    %v3008 = vmul.f32 %v1787, 0.0352262
    %v3009 = vmul.f32 %v1788, 0.0352262
    %v3010 = vmul.f32 %v1789, 0.0352262
    %v3011 = vmul.f32 %v1790, 0.0352262
    %v3012 = vmul.f32 %v1791, 0.0352262
    %v3013 = vmul.f32 %v1792, 0.0352262
    %v3014 = vmul.f32 %v1793, 0.0352262
    %v3015 = vmul.f32 %v1794, 0.0352262
    %v3016 = vmul.f32 %v1795, 0.0352262
    %v3017 = vmul.f32 %v1796, 0.0352262
    %v3018 = vmul.f32 %v1797, 0.0352262
    %v3019 = vmul.f32 %v1798, 0.0352262
    %v3020 = vmul.f32 %v1799, 0.0352262
    %v3021 = vmul.f32 %v1800, 0.0352262
    %v3038 = vrot.slane %v3006, 2
    %v3039 = vrot.slane %v3007, 2
    %v3040 = vsel %vm2002, %v3038, %v3039
    %v3041 = vrot.slane %v3008, 2
    %v3042 = vrot.slane %v3009, 2
    %v3043 = vsel %vm2002, %v3041, %v3042
    %v3044 = vrot.slane %v3010, 2
    %v3045 = vrot.slane %v3011, 2
    %v3046 = vsel %vm2002, %v3044, %v3045
    %v3047 = vrot.slane %v3012, 2
    %v3048 = vrot.slane %v3013, 2
    %v3049 = vsel %vm2002, %v3047, %v3048
    %v3050 = vrot.slane %v3014, 2
    %v3051 = vrot.slane %v3015, 2
    %v3052 = vsel %vm2002, %v3050, %v3051
    %v3053 = vrot.slane %v3016, 2
    %v3054 = vrot.slane %v3017, 2
    %v3055 = vsel %vm2002, %v3053, %v3054
    %v3056 = vrot.slane %v3018, 2
    %v3057 = vrot.slane %v3019, 2
    %v3058 = vsel %vm2002, %v3056, %v3057
    %v3059 = vrot.slane %v3020, 2
    %v3060 = vrot.slane %v3021, 2
    %v3061 = vsel %vm2002, %v3059, %v3060
    %v3070 = vadd.f32 %v2998, %v3040
    %v3071 = vadd.f32 %v2999, %v3043
    %v3072 = vadd.f32 %v3000, %v3046
    %v3073 = vadd.f32 %v3001, %v3049
    %v3074 = vadd.f32 %v3002, %v3052
    %v3075 = vadd.f32 %v3003, %v3055
    %v3076 = vadd.f32 %v3004, %v3058
    %v3077 = vadd.f32 %v3005, %v3061
    %s3078 = scalar_lea.vmem [#allocation2], 24
    %3079 = vst.msk [vmem:[%s3078] sm:$0xff] %vm2115, %v3070
    %3080 = vst.msk [vmem:[%s3078 + $0x20] sm:$0xff] %vm2115, %v3071
    %3081 = vst.msk [vmem:[%s3078 + $0x40] sm:$0xff] %vm2115, %v3072
    %3082 = vst.msk [vmem:[%s3078 + $0x60] sm:$0xff] %vm2115, %v3073
    %3083 = vst.msk [vmem:[%s3078 + $0x80] sm:$0xff] %vm2115, %v3074
    %3084 = vst.msk [vmem:[%s3078 + $0xa0] sm:$0xff] %vm2115, %v3075
    %3085 = vst.msk [vmem:[%s3078 + $0xc0] sm:$0xff] %vm2115, %v3076
    %3086 = vst.msk [vmem:[%s3078 + $0xe0] sm:$0xff] %vm2115, %v3077
    // Predicated region
    $region6: #{tpu_custom_call.1} parent=1 // pred_check
      _
    $region7: #{tpu_custom_call.1} parent=1 // pred_check_branch
      %3088 = sbr.rel (0) target = $region9
    $region8: #{tpu_custom_call.1} parent=1 // pred_region
      %s3090 = ssub.s32 4096, 4096
      %3091 = vsyncadd [#allocation3], %s3090
      %s3092 = sshll.u32 [#allocation2], 4
      %s3093 = int_to_ptr.vmem [resolvable:$true] %s3092
      %3098 = dma.vmem_to_hbm [thread:$0]  %s3093, 4096, %s1, [#allocation3], 128, 128, 8
    $region9: #{tpu_custom_call.1} parent=1 // pred_fallthru
      _
    // Predicated region
    $region10: #{tpu_custom_call.1} parent=1 // pred_check
      _
    $region11: #{tpu_custom_call.1} parent=1 // pred_check_branch
      %3100 = sbr.rel (0) target = $region13
    $region12: #{tpu_custom_call.1} parent=1 // pred_region
      %3101 = dma.done [#allocation3], 4096
    $region13: #{tpu_custom_call.1} parent=1 // pred_fallthru
      _
    %3102 = vsyncpa [#allocation3], 1

</llo_original>
